<compile_context>
chip_gen: v5e
topology: v5e:2x2
jax: 0.10.0
libtpu: 0.0.40
codegen_flags: <defaults>
</compile_context>

<pallas_src>
import numpy as np
import jax
import jax.numpy as jnp
from jax.experimental import pallas as pl
from jax.experimental.pallas import tpu as pltpu


# ------------------------------ Pallas kernel -------------------------------

_SELU_ALPHA = 1.6732632423543772
_SELU_SCALE = 1.0507009873554805


def _selu(x):
    # selu(x) = scale * (x if x > 0 else alpha * (exp(x) - 1)); clamp the exp
    # argument so the unselected branch never overflows.
    neg = _SELU_ALPHA * (jnp.exp(jnp.minimum(x, 0.0)) - 1.0)
    return _SELU_SCALE * jnp.where(x > 0.0, x, neg)


def _zero_halo(ref):
    """Zero only the 1-element border of a (H+2, W+2, C) scratch (cheap,
    done every grid step so both megacore TCs see an initialized halo)."""
    H2, W2, C = ref.shape
    z_row = jnp.zeros((1, W2, C), ref.dtype)
    ref[0:1, :, :] = z_row
    ref[H2 - 1:H2, :, :] = z_row
    z_col = jnp.zeros((H2, 1, C), ref.dtype)
    ref[:, 0:1, :] = z_col
    ref[:, W2 - 1:W2, :] = z_col


def _conv3x3_selu(src_ref, w_ref, b_ref, Hp, Wp):
    """3x3 'SAME' conv from a zero-haloed (Hp+2, Wp+2, Cin) VMEM ref.

    Per-kernel-row accumulating matmuls: 3 MXU dots with K = 3*Cin each
    (no 9x im2col buffer).  Taps are sliced directly from the ref so they
    stream from VMEM instead of holding the whole padded block live.
    """
    c_in = src_ref.shape[2]
    c_out = w_ref.shape[2]
    acc = None
    for ky in range(3):
        lhs = jnp.concatenate(
            [src_ref[ky:ky + Hp, kx:kx + Wp, :] for kx in range(3)],
            axis=-1).reshape(Hp * Wp, 3 * c_in)
        part = jnp.dot(lhs, w_ref[ky], preferred_element_type=jnp.float32)
        acc = part if acc is None else acc + part
    return _selu(acc + b_ref[...])                       # f32 epilogue


def _down_double_conv_kernel(xp_ref, w1_ref, b1_ref, w2_ref, b2_ref,
                             o_ref, xpad_ref, h1pad_ref):
    # xp_ref:    (1, Hp, Wp, Cin)     bf16  pooled input (one image)
    # w1_ref:    (3, 3*Cin,  Cmid)    bf16  resident (per-kernel-row layout)
    # b1_ref:    (1, Cmid)            f32   resident
    # w2_ref:    (3, 3*Cmid, Cout)    bf16  resident
    # b2_ref:    (1, Cout)            f32   resident
    # o_ref:     (1, Hp, Wp, Cout)    bf16
    # xpad_ref:  (Hp+2, Wp+2, Cin)    bf16  VMEM scratch (input + zero halo)
    # h1pad_ref: (Hp+2, Wp+2, Cmid)   bf16  VMEM scratch (conv1 out + zero halo)
    Hp, Wp, Cout = o_ref.shape[1], o_ref.shape[2], o_ref.shape[3]
    Cmid = h1pad_ref.shape[2]

    # Zero only the halo borders (every step; correct under megacore sharding).
    _zero_halo(xpad_ref)
    _zero_halo(h1pad_ref)

    # Fused pad=1: pooled image goes into the haloed scratch interior.
    # (The offset-1 interior store along W is a masked vst; acceptable here —
    #  at scale, over-allocate so the interior starts on a sublane boundary.)
    xpad_ref[1:1 + Hp, 1:1 + Wp, :] = xp_ref[0]

    # conv1 + SELU; result stays on-chip in the second haloed scratch.
    h1 = _conv3x3_selu(xpad_ref, w1_ref, b1_ref, Hp, Wp)
    # Dropout(0.5): identity (eval mode) — see TODO(synk) at top of file.
    h1pad_ref[1:1 + Hp, 1:1 + Wp, :] = (
        h1.reshape(Hp, Wp, Cmid).astype(h1pad_ref.dtype))

    # conv2 + SELU; bf16 NHWC store (lane-dense at real U-Net channel counts).
    h2 = _conv3x3_selu(h1pad_ref, w2_ref, b2_ref, Hp, Wp)
    o_ref[0] = h2.reshape(Hp, Wp, Cout).astype(o_ref.dtype)


# ------------------------------- wrapper -------------------------------------

def _prep_conv_params(w, b):
    """Torch conv layout (Cout, Cin, 3, 3) -> per-kernel-row matmul layout
    (3, 3*Cin, Cout) with rows of each matrix ordered (kx, ci)."""
    cout, cin = w.shape[0], w.shape[1]
    wm = jnp.transpose(w, (2, 3, 1, 0)).reshape(3, 3 * cin, cout)
    return wm.astype(jnp.bfloat16), b.reshape(1, cout).astype(jnp.float32)


def _vmem_limit_bytes():
    """Per-generation VMEM budget: leave headroom under physical capacity."""
    try:
        cap = pltpu.get_tpu_info().vmem_capacity_bytes
        return int(min(96 << 20, max(32 << 20, cap - (16 << 20))))
    except Exception:
        return 32 << 20          # chip-safe default


def down_forward(x_nchw, params):
    """Forward pass of `Down`: MaxPool2d(2) -> Conv3x3+SELU -> Conv3x3+SELU.

    Takes the torch-layout NCHW f32 input; returns NHWC bf16 (keep NHWC
    end-to-end downstream; transpose outside only if NCHW is really needed).
    """
    N, Cin, H, W = x_nchw.shape
    Hp, Wp = H // 2, W // 2
    w1, b1 = _prep_conv_params(params["conv1_w"], params["conv1_b"])
    w2, b2 = _prep_conv_params(params["conv2_w"], params["conv2_b"])
    Cmid, Cout = w1.shape[2], w2.shape[2]

    # Single fused XLA prologue: NCHW->NHWC + 2x2 max-pool + bf16 cast.
    # Reads the input once, writes only the pooled bf16 tensor (1/16 of the
    # input bytes).  No padded tensor is materialized in HBM.
    xp = jnp.transpose(x_nchw, (0, 2, 3, 1))
    xp = xp.reshape(N, Hp, 2, Wp, 2, Cin).max(axis=(2, 4)).astype(jnp.bfloat16)

    out = pl.pallas_call(
        _down_double_conv_kernel,
        out_shape=jax.ShapeDtypeStruct((N, Hp, Wp, Cout), jnp.bfloat16),
        grid_spec=pltpu.PrefetchScalarGridSpec(
            num_scalar_prefetch=0,
            grid=(N,),                                    # pipelined over images
            in_specs=[
                pl.BlockSpec((1, Hp, Wp, Cin), lambda n: (n, 0, 0, 0)),
                pl.BlockSpec((3, 3 * Cin, Cmid), lambda n: (0, 0, 0)),   # resident
                pl.BlockSpec((1, Cmid), lambda n: (0, 0)),               # resident
                pl.BlockSpec((3, 3 * Cmid, Cout), lambda n: (0, 0, 0)),  # resident
                pl.BlockSpec((1, Cout), lambda n: (0, 0)),               # resident
            ],
            out_specs=pl.BlockSpec((1, Hp, Wp, Cout), lambda n: (n, 0, 0, 0)),
            scratch_shapes=[
                pltpu.VMEM((Hp + 2, Wp + 2, Cin), jnp.bfloat16),
                pltpu.VMEM((Hp + 2, Wp + 2, Cmid), jnp.bfloat16),
            ],
        ),
        compiler_params=pltpu.CompilerParams(
            dimension_semantics=("parallel",),            # megacore on v7x
            vmem_limit_bytes=_vmem_limit_bytes(),
        ),
    )(xp, w1, b1, w2, b2)

    return out                                            # NHWC bf16


# --------------------------- params / reference ------------------------------

def init_down_params(key, in_ch, out_ch, mid_ch=None):
    """PyTorch-default-like init (uniform +-1/sqrt(fan_in)), torch weight layout."""
    mid_ch = mid_ch or out_ch
    k1, k2, k3, k4 = jax.random.split(key, 4)

    def conv_init(kw, kb, cin, cout):
        bound = 1.0 / np.sqrt(cin * 9)
        w = jax.random.uniform(kw, (cout, cin, 3, 3), jnp.float32, -bound, bound)
        b = jax.random.uniform(kb, (cout,), jnp.float32, -bound, bound)
        return w, b

    w1, b1 = conv_init(k1, k2, in_ch, mid_ch)
    w2, b2 = conv_init(k3, k4, mid_ch, out_ch)
    return {"conv1_w": w1, "conv1_b": b1, "conv2_w": w2, "conv2_b": b2}


def down_reference(x_nchw, params):
    """Pure-JAX f32 reference (eval mode), NCHW in / NCHW out, for checking."""
    x = jnp.transpose(x_nchw, (0, 2, 3, 1)).astype(jnp.float32)
    N, H, W, C = x.shape
    xp = x.reshape(N, H // 2, 2, W // 2, 2, C).max(axis=(2, 4))

    def conv(h, w, b):
        return jax.lax.conv_general_dilated(
            h, jnp.transpose(w, (2, 3, 1, 0)), (1, 1), "SAME",
            dimension_numbers=("NHWC", "HWIO", "NHWC")) + b

    h = jax.nn.selu(conv(xp, params["conv1_w"], params["conv1_b"]))
    h = jax.nn.selu(conv(h, params["conv2_w"], params["conv2_b"]))
    return jnp.transpose(h, (0, 3, 1, 2))


# ----------------------------------- main ------------------------------------

if __name__ == "__main__":
    key = jax.random.PRNGKey(0)
    kx, kp = jax.random.split(key)

    N, IN_CH, OUT_CH, H, W = 2, 4, 8, 16, 16
    x = jax.random.normal(kx, (N, IN_CH, H, W), jnp.float32)   # NCHW like torch
    params = init_down_params(kp, IN_CH, OUT_CH)

    fwd = jax.jit(down_forward)
    out_nhwc = fwd(x, params)
    jax.block_until_ready(out_nhwc)

    assert out_nhwc.shape == (N, H // 2, W // 2, OUT_CH)
    assert out_nhwc.dtype == jnp.bfloat16

    # Check module semantics against the f32 NCHW reference.
    ref_nchw = down_reference(x, params)
    out_nchw = jnp.transpose(out_nhwc.astype(jnp.float32), (0, 3, 1, 2))
    err = float(jnp.max(jnp.abs(out_nchw - ref_nchw)))
    assert err < 1e-1, f"mismatch vs f32 reference: max abs err {err}"

    print("KERNEL_OK")
</pallas_src>

<mosaic_0001>
module attributes {stable_mosaic.version = 11 : i64} {
  func.func @_down_double_conv_kernel(%arg0: i32, %arg1: memref<1x8x8x4xbf16, #tpu.memory_space<vmem>>, %arg2: memref<3x12x8xbf16, #tpu.memory_space<vmem>>, %arg3: memref<1x8xf32, #tpu.memory_space<vmem>>, %arg4: memref<3x24x8xbf16, #tpu.memory_space<vmem>>, %arg5: memref<1x8xf32, #tpu.memory_space<vmem>>, %arg6: memref<1x8x8x8xbf16, #tpu.memory_space<vmem>>, %arg7: memref<10x10x4xbf16, #tpu.memory_space<vmem>>, %arg8: memref<10x10x8xbf16, #tpu.memory_space<vmem>>) attributes {dimension_semantics = [#tpu.dimension_semantics<parallel>], iteration_bounds = array<i64: 2>, scalar_prefetch = 0 : i64, scratch_operands = 2 : i64, tpu.core_type = #tpu.core_type<tc>, window_params = [{transform_indices = @transform_0, window_bounds = array<i64: 1, 8, 8, 4>}, {pipeline_mode = #tpu.pipeline_mode<synchronous>, transform_indices = @transform_1, window_bounds = array<i64: 3, 12, 8>}, {pipeline_mode = #tpu.pipeline_mode<synchronous>, transform_indices = @transform_2, window_bounds = array<i64: 1, 8>}, {pipeline_mode = #tpu.pipeline_mode<synchronous>, transform_indices = @transform_3, window_bounds = array<i64: 3, 24, 8>}, {pipeline_mode = #tpu.pipeline_mode<synchronous>, transform_indices = @transform_4, window_bounds = array<i64: 1, 8>}, {transform_indices = @transform_5, window_bounds = array<i64: 1, 8, 8, 8>}]} {
    %cst = arith.constant 0.000000e+00 : bf16
    %0 = vector.broadcast %cst : bf16 to vector<1x10x4xbf16>
    %c0 = arith.constant 0 : index
    %c0_0 = arith.constant 0 : index
    %c0_1 = arith.constant 0 : index
    %1 = vector.load %arg7[%c0, %c0_0, %c0_1] : memref<10x10x4xbf16, #tpu.memory_space<vmem>>, vector<1x10x4xbf16>
    tpu.vector_store %arg7[%c0, %c0_0, %c0_1], %0 {strides = array<i32>} : memref<10x10x4xbf16, #tpu.memory_space<vmem>>, vector<1x10x4xbf16>,
    %c9 = arith.constant 9 : index
    %c0_2 = arith.constant 0 : index
    %c0_3 = arith.constant 0 : index
    %2 = vector.load %arg7[%c9, %c0_2, %c0_3] : memref<10x10x4xbf16, #tpu.memory_space<vmem>>, vector<1x10x4xbf16>
    tpu.vector_store %arg7[%c9, %c0_2, %c0_3], %0 {strides = array<i32>} : memref<10x10x4xbf16, #tpu.memory_space<vmem>>, vector<1x10x4xbf16>,
    %cst_4 = arith.constant 0.000000e+00 : bf16
    %3 = vector.broadcast %cst_4 : bf16 to vector<10x1x4xbf16>
    %c0_5 = arith.constant 0 : index
    %c0_6 = arith.constant 0 : index
    %c0_7 = arith.constant 0 : index
    %4 = vector.load %arg7[%c0_5, %c0_6, %c0_7] : memref<10x10x4xbf16, #tpu.memory_space<vmem>>, vector<10x1x4xbf16>
    tpu.vector_store %arg7[%c0_5, %c0_6, %c0_7], %3 {strides = array<i32>} : memref<10x10x4xbf16, #tpu.memory_space<vmem>>, vector<10x1x4xbf16>,
    %c0_8 = arith.constant 0 : index
    %c9_9 = arith.constant 9 : index
    %c0_10 = arith.constant 0 : index
    %5 = vector.load %arg7[%c0_8, %c9_9, %c0_10] : memref<10x10x4xbf16, #tpu.memory_space<vmem>>, vector<10x1x4xbf16>
    tpu.vector_store %arg7[%c0_8, %c9_9, %c0_10], %3 {strides = array<i32>} : memref<10x10x4xbf16, #tpu.memory_space<vmem>>, vector<10x1x4xbf16>,
    %cst_11 = arith.constant 0.000000e+00 : bf16
    %6 = vector.broadcast %cst_11 : bf16 to vector<1x10x8xbf16>
    %c0_12 = arith.constant 0 : index
    %c0_13 = arith.constant 0 : index
    %c0_14 = arith.constant 0 : index
    %7 = vector.load %arg8[%c0_12, %c0_13, %c0_14] : memref<10x10x8xbf16, #tpu.memory_space<vmem>>, vector<1x10x8xbf16>
    tpu.vector_store %arg8[%c0_12, %c0_13, %c0_14], %6 {strides = array<i32>} : memref<10x10x8xbf16, #tpu.memory_space<vmem>>, vector<1x10x8xbf16>,
    %c9_15 = arith.constant 9 : index
    %c0_16 = arith.constant 0 : index
    %c0_17 = arith.constant 0 : index
    %8 = vector.load %arg8[%c9_15, %c0_16, %c0_17] : memref<10x10x8xbf16, #tpu.memory_space<vmem>>, vector<1x10x8xbf16>
    tpu.vector_store %arg8[%c9_15, %c0_16, %c0_17], %6 {strides = array<i32>} : memref<10x10x8xbf16, #tpu.memory_space<vmem>>, vector<1x10x8xbf16>,
    %cst_18 = arith.constant 0.000000e+00 : bf16
    %9 = vector.broadcast %cst_18 : bf16 to vector<10x1x8xbf16>
    %c0_19 = arith.constant 0 : index
    %c0_20 = arith.constant 0 : index
    %c0_21 = arith.constant 0 : index
    %10 = vector.load %arg8[%c0_19, %c0_20, %c0_21] : memref<10x10x8xbf16, #tpu.memory_space<vmem>>, vector<10x1x8xbf16>
    tpu.vector_store %arg8[%c0_19, %c0_20, %c0_21], %9 {strides = array<i32>} : memref<10x10x8xbf16, #tpu.memory_space<vmem>>, vector<10x1x8xbf16>,
    %c0_22 = arith.constant 0 : index
    %c9_23 = arith.constant 9 : index
    %c0_24 = arith.constant 0 : index
    %11 = vector.load %arg8[%c0_22, %c9_23, %c0_24] : memref<10x10x8xbf16, #tpu.memory_space<vmem>>, vector<10x1x8xbf16>
    tpu.vector_store %arg8[%c0_22, %c9_23, %c0_24], %9 {strides = array<i32>} : memref<10x10x8xbf16, #tpu.memory_space<vmem>>, vector<10x1x8xbf16>,
    %c0_25 = arith.constant 0 : index
    %c0_26 = arith.constant 0 : index
    %c0_27 = arith.constant 0 : index
    %c0_28 = arith.constant 0 : index
    %12 = vector.load %arg1[%c0_25, %c0_26, %c0_27, %c0_28] : memref<1x8x8x4xbf16, #tpu.memory_space<vmem>>, vector<1x8x8x4xbf16>
    %13 = vector.shape_cast %12 : vector<1x8x8x4xbf16> to vector<8x8x4xbf16>
    %c1 = arith.constant 1 : index
    %c1_29 = arith.constant 1 : index
    %c0_30 = arith.constant 0 : index
    %14 = vector.load %arg7[%c1, %c1_29, %c0_30] : memref<10x10x4xbf16, #tpu.memory_space<vmem>>, vector<8x8x4xbf16>
    tpu.vector_store %arg7[%c1, %c1_29, %c0_30], %13 {strides = array<i32>} : memref<10x10x4xbf16, #tpu.memory_space<vmem>>, vector<8x8x4xbf16>,
    %c0_31 = arith.constant 0 : index
    %c0_32 = arith.constant 0 : index
    %c0_33 = arith.constant 0 : index
    %15 = vector.load %arg7[%c0_31, %c0_32, %c0_33] : memref<10x10x4xbf16, #tpu.memory_space<vmem>>, vector<8x8x4xbf16>
    %c0_34 = arith.constant 0 : index
    %c1_35 = arith.constant 1 : index
    %c0_36 = arith.constant 0 : index
    %16 = vector.load %arg7[%c0_34, %c1_35, %c0_36] : memref<10x10x4xbf16, #tpu.memory_space<vmem>>, vector<8x8x4xbf16>
    %c0_37 = arith.constant 0 : index
    %c2 = arith.constant 2 : index
    %c0_38 = arith.constant 0 : index
    %17 = vector.load %arg7[%c0_37, %c2, %c0_38] : memref<10x10x4xbf16, #tpu.memory_space<vmem>>, vector<8x8x4xbf16>
    %18 = tpu.concatenate %15, %16, %17 in 2 : vector<8x8x4xbf16>, vector<8x8x4xbf16>, vector<8x8x4xbf16> -> vector<8x8x12xbf16>
    %19 = vector.shape_cast %18 : vector<8x8x12xbf16> to vector<64x12xbf16>
    %c0_39 = arith.constant 0 : index
    %c0_40 = arith.constant 0 : index
    %c0_41 = arith.constant 0 : index
    %20 = vector.load %arg2[%c0_39, %c0_40, %c0_41] : memref<3x12x8xbf16, #tpu.memory_space<vmem>>, vector<1x12x8xbf16>
    %21 = vector.shape_cast %20 : vector<1x12x8xbf16> to vector<12x8xbf16>
    %cst_42 = arith.constant dense<0.000000e+00> : vector<64x8xf32>
    %22 = tpu.matmul %19, %21, %cst_42 {dimension_numbers = #tpu.dot_dimension_numbers<[1], [0], [0], [1], [0, 0, 1, 1], [], []>} : vector<64x12xbf16>, vector<12x8xbf16>, vector<64x8xf32> -> vector<64x8xf32>
    %c1_43 = arith.constant 1 : index
    %c0_44 = arith.constant 0 : index
    %c0_45 = arith.constant 0 : index
    %23 = vector.load %arg7[%c1_43, %c0_44, %c0_45] : memref<10x10x4xbf16, #tpu.memory_space<vmem>>, vector<8x8x4xbf16>
    %c1_46 = arith.constant 1 : index
    %c1_47 = arith.constant 1 : index
    %c0_48 = arith.constant 0 : index
    %24 = vector.load %arg7[%c1_46, %c1_47, %c0_48] : memref<10x10x4xbf16, #tpu.memory_space<vmem>>, vector<8x8x4xbf16>
    %c1_49 = arith.constant 1 : index
    %c2_50 = arith.constant 2 : index
    %c0_51 = arith.constant 0 : index
    %25 = vector.load %arg7[%c1_49, %c2_50, %c0_51] : memref<10x10x4xbf16, #tpu.memory_space<vmem>>, vector<8x8x4xbf16>
    %26 = tpu.concatenate %23, %24, %25 in 2 : vector<8x8x4xbf16>, vector<8x8x4xbf16>, vector<8x8x4xbf16> -> vector<8x8x12xbf16>
    %27 = vector.shape_cast %26 : vector<8x8x12xbf16> to vector<64x12xbf16>
    %c1_52 = arith.constant 1 : index
    %c0_53 = arith.constant 0 : index
    %c0_54 = arith.constant 0 : index
    %28 = vector.load %arg2[%c1_52, %c0_53, %c0_54] : memref<3x12x8xbf16, #tpu.memory_space<vmem>>, vector<1x12x8xbf16>
    %29 = vector.shape_cast %28 : vector<1x12x8xbf16> to vector<12x8xbf16>
    %cst_55 = arith.constant dense<0.000000e+00> : vector<64x8xf32>
    %30 = tpu.matmul %27, %29, %cst_55 {dimension_numbers = #tpu.dot_dimension_numbers<[1], [0], [0], [1], [0, 0, 1, 1], [], []>} : vector<64x12xbf16>, vector<12x8xbf16>, vector<64x8xf32> -> vector<64x8xf32>
    %31 = arith.addf %22, %30 : vector<64x8xf32>
    %c2_56 = arith.constant 2 : index
    %c0_57 = arith.constant 0 : index
    %c0_58 = arith.constant 0 : index
    %32 = vector.load %arg7[%c2_56, %c0_57, %c0_58] : memref<10x10x4xbf16, #tpu.memory_space<vmem>>, vector<8x8x4xbf16>
    %c2_59 = arith.constant 2 : index
    %c1_60 = arith.constant 1 : index
    %c0_61 = arith.constant 0 : index
    %33 = vector.load %arg7[%c2_59, %c1_60, %c0_61] : memref<10x10x4xbf16, #tpu.memory_space<vmem>>, vector<8x8x4xbf16>
    %c2_62 = arith.constant 2 : index
    %c2_63 = arith.constant 2 : index
    %c0_64 = arith.constant 0 : index
    %34 = vector.load %arg7[%c2_62, %c2_63, %c0_64] : memref<10x10x4xbf16, #tpu.memory_space<vmem>>, vector<8x8x4xbf16>
    %35 = tpu.concatenate %32, %33, %34 in 2 : vector<8x8x4xbf16>, vector<8x8x4xbf16>, vector<8x8x4xbf16> -> vector<8x8x12xbf16>
    %36 = vector.shape_cast %35 : vector<8x8x12xbf16> to vector<64x12xbf16>
    %c2_65 = arith.constant 2 : index
    %c0_66 = arith.constant 0 : index
    %c0_67 = arith.constant 0 : index
    %37 = vector.load %arg2[%c2_65, %c0_66, %c0_67] : memref<3x12x8xbf16, #tpu.memory_space<vmem>>, vector<1x12x8xbf16>
    %38 = vector.shape_cast %37 : vector<1x12x8xbf16> to vector<12x8xbf16>
    %cst_68 = arith.constant dense<0.000000e+00> : vector<64x8xf32>
    %39 = tpu.matmul %36, %38, %cst_68 {dimension_numbers = #tpu.dot_dimension_numbers<[1], [0], [0], [1], [0, 0, 1, 1], [], []>} : vector<64x12xbf16>, vector<12x8xbf16>, vector<64x8xf32> -> vector<64x8xf32>
    %40 = arith.addf %31, %39 : vector<64x8xf32>
    %c0_69 = arith.constant 0 : index
    %c0_70 = arith.constant 0 : index
    %41 = vector.load %arg3[%c0_69, %c0_70] : memref<1x8xf32, #tpu.memory_space<vmem>>, vector<1x8xf32>
    %42 = vector.broadcast %41 : vector<1x8xf32> to vector<64x8xf32>
    %43 = arith.addf %40, %42 : vector<64x8xf32>
    %cst_71 = arith.constant 0.000000e+00 : f32
    %44 = vector.broadcast %cst_71 : f32 to vector<64x8xf32>
    %45 = arith.minimumf %43, %44 : vector<64x8xf32>
    %46 = math.exp %45 : vector<64x8xf32>
    %cst_72 = arith.constant 1.000000e+00 : f32
    %47 = vector.broadcast %cst_72 : f32 to vector<64x8xf32>
    %48 = arith.subf %46, %47 : vector<64x8xf32>
    %cst_73 = arith.constant 1.67326319 : f32
    %49 = vector.broadcast %cst_73 : f32 to vector<64x8xf32>
    %50 = arith.mulf %49, %48 : vector<64x8xf32>
    %cst_74 = arith.constant 0.000000e+00 : f32
    %51 = vector.broadcast %cst_74 : f32 to vector<64x8xf32>
    %52 = arith.cmpf ogt, %43, %51 : vector<64x8xf32>
    %53 = arith.select %52, %43, %50 : vector<64x8xi1>, vector<64x8xf32>
    %cst_75 = arith.constant 1.05070102 : f32
    %54 = vector.broadcast %cst_75 : f32 to vector<64x8xf32>
    %55 = arith.mulf %54, %53 : vector<64x8xf32>
    %56 = vector.shape_cast %55 : vector<64x8xf32> to vector<8x8x8xf32>
    %57 = arith.truncf %56 : vector<8x8x8xf32> to vector<8x8x8xbf16>
    %c1_76 = arith.constant 1 : index
    %c1_77 = arith.constant 1 : index
    %c0_78 = arith.constant 0 : index
    %58 = vector.load %arg8[%c1_76, %c1_77, %c0_78] : memref<10x10x8xbf16, #tpu.memory_space<vmem>>, vector<8x8x8xbf16>
    tpu.vector_store %arg8[%c1_76, %c1_77, %c0_78], %57 {strides = array<i32>} : memref<10x10x8xbf16, #tpu.memory_space<vmem>>, vector<8x8x8xbf16>,
    %c0_79 = arith.constant 0 : index
    %c0_80 = arith.constant 0 : index
    %c0_81 = arith.constant 0 : index
    %59 = vector.load %arg8[%c0_79, %c0_80, %c0_81] : memref<10x10x8xbf16, #tpu.memory_space<vmem>>, vector<8x8x8xbf16>
    %c0_82 = arith.constant 0 : index
    %c1_83 = arith.constant 1 : index
    %c0_84 = arith.constant 0 : index
    %60 = vector.load %arg8[%c0_82, %c1_83, %c0_84] : memref<10x10x8xbf16, #tpu.memory_space<vmem>>, vector<8x8x8xbf16>
    %c0_85 = arith.constant 0 : index
    %c2_86 = arith.constant 2 : index
    %c0_87 = arith.constant 0 : index
    %61 = vector.load %arg8[%c0_85, %c2_86, %c0_87] : memref<10x10x8xbf16, #tpu.memory_space<vmem>>, vector<8x8x8xbf16>
    %62 = tpu.concatenate %59, %60, %61 in 2 : vector<8x8x8xbf16>, vector<8x8x8xbf16>, vector<8x8x8xbf16> -> vector<8x8x24xbf16>
    %63 = vector.shape_cast %62 : vector<8x8x24xbf16> to vector<64x24xbf16>
    %c0_88 = arith.constant 0 : index
    %c0_89 = arith.constant 0 : index
    %c0_90 = arith.constant 0 : index
    %64 = vector.load %arg4[%c0_88, %c0_89, %c0_90] : memref<3x24x8xbf16, #tpu.memory_space<vmem>>, vector<1x24x8xbf16>
    %65 = vector.shape_cast %64 : vector<1x24x8xbf16> to vector<24x8xbf16>
    %cst_91 = arith.constant dense<0.000000e+00> : vector<64x8xf32>
    %66 = tpu.matmul %63, %65, %cst_91 {dimension_numbers = #tpu.dot_dimension_numbers<[1], [0], [0], [1], [0, 0, 1, 1], [], []>} : vector<64x24xbf16>, vector<24x8xbf16>, vector<64x8xf32> -> vector<64x8xf32>
    %c1_92 = arith.constant 1 : index
    %c0_93 = arith.constant 0 : index
    %c0_94 = arith.constant 0 : index
    %67 = vector.load %arg8[%c1_92, %c0_93, %c0_94] : memref<10x10x8xbf16, #tpu.memory_space<vmem>>, vector<8x8x8xbf16>
    %c1_95 = arith.constant 1 : index
    %c1_96 = arith.constant 1 : index
    %c0_97 = arith.constant 0 : index
    %68 = vector.load %arg8[%c1_95, %c1_96, %c0_97] : memref<10x10x8xbf16, #tpu.memory_space<vmem>>, vector<8x8x8xbf16>
    %c1_98 = arith.constant 1 : index
    %c2_99 = arith.constant 2 : index
    %c0_100 = arith.constant 0 : index
    %69 = vector.load %arg8[%c1_98, %c2_99, %c0_100] : memref<10x10x8xbf16, #tpu.memory_space<vmem>>, vector<8x8x8xbf16>
    %70 = tpu.concatenate %67, %68, %69 in 2 : vector<8x8x8xbf16>, vector<8x8x8xbf16>, vector<8x8x8xbf16> -> vector<8x8x24xbf16>
    %71 = vector.shape_cast %70 : vector<8x8x24xbf16> to vector<64x24xbf16>
    %c1_101 = arith.constant 1 : index
    %c0_102 = arith.constant 0 : index
    %c0_103 = arith.constant 0 : index
    %72 = vector.load %arg4[%c1_101, %c0_102, %c0_103] : memref<3x24x8xbf16, #tpu.memory_space<vmem>>, vector<1x24x8xbf16>
    %73 = vector.shape_cast %72 : vector<1x24x8xbf16> to vector<24x8xbf16>
    %cst_104 = arith.constant dense<0.000000e+00> : vector<64x8xf32>
    %74 = tpu.matmul %71, %73, %cst_104 {dimension_numbers = #tpu.dot_dimension_numbers<[1], [0], [0], [1], [0, 0, 1, 1], [], []>} : vector<64x24xbf16>, vector<24x8xbf16>, vector<64x8xf32> -> vector<64x8xf32>
    %75 = arith.addf %66, %74 : vector<64x8xf32>
    %c2_105 = arith.constant 2 : index
    %c0_106 = arith.constant 0 : index
    %c0_107 = arith.constant 0 : index
    %76 = vector.load %arg8[%c2_105, %c0_106, %c0_107] : memref<10x10x8xbf16, #tpu.memory_space<vmem>>, vector<8x8x8xbf16>
    %c2_108 = arith.constant 2 : index
    %c1_109 = arith.constant 1 : index
    %c0_110 = arith.constant 0 : index
    %77 = vector.load %arg8[%c2_108, %c1_109, %c0_110] : memref<10x10x8xbf16, #tpu.memory_space<vmem>>, vector<8x8x8xbf16>
    %c2_111 = arith.constant 2 : index
    %c2_112 = arith.constant 2 : index
    %c0_113 = arith.constant 0 : index
    %78 = vector.load %arg8[%c2_111, %c2_112, %c0_113] : memref<10x10x8xbf16, #tpu.memory_space<vmem>>, vector<8x8x8xbf16>
    %79 = tpu.concatenate %76, %77, %78 in 2 : vector<8x8x8xbf16>, vector<8x8x8xbf16>, vector<8x8x8xbf16> -> vector<8x8x24xbf16>
    %80 = vector.shape_cast %79 : vector<8x8x24xbf16> to vector<64x24xbf16>
    %c2_114 = arith.constant 2 : index
    %c0_115 = arith.constant 0 : index
    %c0_116 = arith.constant 0 : index
    %81 = vector.load %arg4[%c2_114, %c0_115, %c0_116] : memref<3x24x8xbf16, #tpu.memory_space<vmem>>, vector<1x24x8xbf16>
    %82 = vector.shape_cast %81 : vector<1x24x8xbf16> to vector<24x8xbf16>
    %cst_117 = arith.constant dense<0.000000e+00> : vector<64x8xf32>
    %83 = tpu.matmul %80, %82, %cst_117 {dimension_numbers = #tpu.dot_dimension_numbers<[1], [0], [0], [1], [0, 0, 1, 1], [], []>} : vector<64x24xbf16>, vector<24x8xbf16>, vector<64x8xf32> -> vector<64x8xf32>
    %84 = arith.addf %75, %83 : vector<64x8xf32>
    %c0_118 = arith.constant 0 : index
    %c0_119 = arith.constant 0 : index
    %85 = vector.load %arg5[%c0_118, %c0_119] : memref<1x8xf32, #tpu.memory_space<vmem>>, vector<1x8xf32>
    %86 = vector.broadcast %85 : vector<1x8xf32> to vector<64x8xf32>
    %87 = arith.addf %84, %86 : vector<64x8xf32>
    %cst_120 = arith.constant 0.000000e+00 : f32
    %88 = vector.broadcast %cst_120 : f32 to vector<64x8xf32>
    %89 = arith.minimumf %87, %88 : vector<64x8xf32>
    %90 = math.exp %89 : vector<64x8xf32>
    %cst_121 = arith.constant 1.000000e+00 : f32
    %91 = vector.broadcast %cst_121 : f32 to vector<64x8xf32>
    %92 = arith.subf %90, %91 : vector<64x8xf32>
    %cst_122 = arith.constant 1.67326319 : f32
    %93 = vector.broadcast %cst_122 : f32 to vector<64x8xf32>
    %94 = arith.mulf %93, %92 : vector<64x8xf32>
    %cst_123 = arith.constant 0.000000e+00 : f32
    %95 = vector.broadcast %cst_123 : f32 to vector<64x8xf32>
    %96 = arith.cmpf ogt, %87, %95 : vector<64x8xf32>
    %97 = arith.select %96, %87, %94 : vector<64x8xi1>, vector<64x8xf32>
    %cst_124 = arith.constant 1.05070102 : f32
    %98 = vector.broadcast %cst_124 : f32 to vector<64x8xf32>
    %99 = arith.mulf %98, %97 : vector<64x8xf32>
    %100 = vector.shape_cast %99 : vector<64x8xf32> to vector<8x8x8xf32>
    %101 = arith.truncf %100 : vector<8x8x8xf32> to vector<8x8x8xbf16>
    %c0_125 = arith.constant 0 : index
    %c0_126 = arith.constant 0 : index
    %c0_127 = arith.constant 0 : index
    %c0_128 = arith.constant 0 : index
    %102 = vector.load %arg6[%c0_125, %c0_126, %c0_127, %c0_128] : memref<1x8x8x8xbf16, #tpu.memory_space<vmem>>, vector<1x8x8x8xbf16>
    %103 = vector.shape_cast %102 : vector<1x8x8x8xbf16> to vector<8x8x8xbf16>
    %104 = vector.shape_cast %101 : vector<8x8x8xbf16> to vector<1x8x8x8xbf16>
    tpu.vector_store %arg6[%c0_125, %c0_126, %c0_127, %c0_128], %104 {strides = array<i32>} : memref<1x8x8x8xbf16, #tpu.memory_space<vmem>>, vector<1x8x8x8xbf16>,
    return
  }
  func.func @transform_0(%arg0: i32) -> (i32, i32, i32, i32) {
    %c0_i32 = arith.constant 0 : i32
    %c0_i32_0 = arith.constant 0 : i32
    %c0_i32_1 = arith.constant 0 : i32
    %c0_i32_2 = arith.constant 0 : i32
    return %arg0, %c0_i32, %c0_i32_0, %c0_i32_1 : i32, i32, i32, i32
  }
  func.func @transform_1(%arg0: i32) -> (i32, i32, i32) {
    %c0_i32 = arith.constant 0 : i32
    %c0_i32_0 = arith.constant 0 : i32
    %c0_i32_1 = arith.constant 0 : i32
    %c0_i32_2 = arith.constant 0 : i32
    return %c0_i32, %c0_i32_0, %c0_i32_1 : i32, i32, i32
  }
  func.func @transform_2(%arg0: i32) -> (i32, i32) {
    %c0_i32 = arith.constant 0 : i32
    %c0_i32_0 = arith.constant 0 : i32
    %c0_i32_1 = arith.constant 0 : i32
    return %c0_i32, %c0_i32_0 : i32, i32
  }
  func.func @transform_3(%arg0: i32) -> (i32, i32, i32) {
    %c0_i32 = arith.constant 0 : i32
    %c0_i32_0 = arith.constant 0 : i32
    %c0_i32_1 = arith.constant 0 : i32
    %c0_i32_2 = arith.constant 0 : i32
    return %c0_i32, %c0_i32_0, %c0_i32_1 : i32, i32, i32
  }
  func.func @transform_4(%arg0: i32) -> (i32, i32) {
    %c0_i32 = arith.constant 0 : i32
    %c0_i32_0 = arith.constant 0 : i32
    %c0_i32_1 = arith.constant 0 : i32
    return %c0_i32, %c0_i32_0 : i32, i32
  }
  func.func @transform_5(%arg0: i32) -> (i32, i32, i32, i32) {
    %c0_i32 = arith.constant 0 : i32
    %c0_i32_0 = arith.constant 0 : i32
    %c0_i32_1 = arith.constant 0 : i32
    %c0_i32_2 = arith.constant 0 : i32
    return %arg0, %c0_i32, %c0_i32_0, %c0_i32_1 : i32, i32, i32, i32
  }
}

</mosaic_0001>

<llo_original>
// kernel: down_forward.1
$region0: #{down_forward.1}
  #allocation0 [shape = 'u32[]', space=smem, size = 0x4, offset = 0x4, fixed_abs, tag = 'smem constant byte address 0x4 - core index']
  #allocation1 [shape = 'u32[72,128]{1,0:T(1,128)}', space=vmem, size = 0x9000, scoped, tag = 'internal scratch']
  #allocation2 [shape = 'bf16[10,10,4]{2,1,0:T(8,128)(2,1)}', space=vmem, size = 0xa000, scoped, tag = 'scratch operand']
  #allocation3 [shape = 'bf16[10,10,8]{2,1,0:T(8,128)(2,1)}', space=vmem, size = 0xa000, scoped, tag = 'scratch operand']
  %s0 = inlined_call_operand.vmem [shape: bf16[2,8,8,4], index: 0, kind: input, shape index: {}]
  %s1 = inlined_call_operand.vmem [shape: bf16[3,12,8], index: 1, kind: input, shape index: {}]
  %s2 = inlined_call_operand.vmem [shape: f32[1,8], index: 2, kind: input, shape index: {}]
  %s3 = inlined_call_operand.vmem [shape: bf16[3,24,8], index: 3, kind: input, shape index: {}]
  %s4 = inlined_call_operand.vmem [shape: f32[1,8], index: 4, kind: input, shape index: {}]
  %s5 = inlined_call_operand.hbm [shape: bf16[2,8,8,8], index: 5, kind: output, shape index: {}]
  %s6 = sld [smem:[#allocation0]]
  $region53: #{down_forward.1} parent=0
    _
  %s8 = ssub.s32 1, %s6
  %s9 = scalar_select 0, %s8, %s6
  $region1: #{down_forward.1} parent=0
    #allocation4 [shape = 'u8[32768]{0}', space=vmem, size = 0x8000, scoped, tag = 'output window, operand 0']
    #allocation5 [shape = 's32[2]{0}', space=sflag, size = 0x8, scoped, tag = 'scoped memory for down_forward.1']
    %10 = vsyncpa [#allocation5], 0
    %s11 = scalar_lea.sflag [#allocation5], 1
    %12 = vsyncpa %s11, 0
    loop: start=0, step=1, limit=4
    $region2: #{down_forward.1} parent=1 // loop_pre_header
      _
    $region3: #{down_forward.1} parent=1 // loop_header
      %s14 = sphi 0, %s18
      %p15 = scmp.ge.s32.totalorder %s14, 4
      %s24 = sphi 0, %s26
      %s27 = sphi 0, %s24
      %s28 = sphi 0, %s27
      %s44 = sphi 0, %s28
      %s48 = sphi 0, %s48
      %s50 = sphi 0, %s48
      %s51 = sphi 0, %s50
      %s65 = sphi 0, %s51
      %s69 = sphi 0, %s69
      %s71 = sphi 0, %s69
      %s72 = sphi 0, %s71
      %s86 = sphi 0, %s72
      %s90 = sphi 0, %s90
      %s92 = sphi 0, %s90
      %s93 = sphi 0, %s92
      %s107 = sphi 0, %s93
      %s111 = sphi 0, %s111
      %s113 = sphi 0, %s111
      %s114 = sphi 0, %s113
      %s128 = sphi 0, %s114
      %s134 = sphi 0, %s136
      %s137 = sphi 0, %s134
      %s138 = sphi 0, %s137
      %s154 = sphi 0, %s138
    $region4: #{down_forward.1} parent=1 // loop_header_branch
      %17 = sbr.rel (%p15) target = $region8
    $region5: #{down_forward.1} parent=1 // loop_body
      %s19 = ssub.s32 %s14, 1
      %s20 = ssub.s32 %s14, 2
      %s21 = sadd.s32 %s14, 1
      %s22 = ssub.s32 %s14, %s21
      %p23 = scmp.eq.s32.totalorder %s22, 0
      %s25 = sadd.s32 %s24, 1
      %s26 = scalar_select %p23, %s24, %s25
      %p29 = pneg %p23
      %p30 = scmp.eq.s32.totalorder %s14, 1
      %p31 = por %p29, %p30
      %p32 = scmp.ne.s32.totalorder %s24, %s27
      %p33 = scmp.eq.s32.totalorder %s14, 0
      %p34 = por %p32, %p33
      %p35 = scmp.ne.s32.totalorder %s24, %s27
      %p36 = scmp.eq.s32.totalorder %s19, 1
      %p37 = por %p35, %p36
      %p38 = scmp.ne.s32.totalorder %s27, %s28
      %p39 = scmp.eq.s32.totalorder %s19, 0
      %p40 = por %p38, %p39
      %p41 = scmp.ne.s32.totalorder %s27, %s28
      %p42 = scmp.eq.s32.totalorder %s20, 1
      %p43 = por %p41, %p42
      %p45 = scmp.ne.s32.totalorder %s28, %s44
      %p46 = scmp.eq.s32.totalorder %s20, 0
      %p47 = por %p45, %p46
      %s49 = sadd.s32 %s48, 1
      %p52 = scmp.eq.s32.totalorder %s14, 1
      %p53 = scmp.ne.s32.totalorder %s48, %s50
      %p54 = scmp.eq.s32.totalorder %s14, 0
      %p55 = por %p53, %p54
      %p56 = scmp.ne.s32.totalorder %s48, %s50
      %p57 = scmp.eq.s32.totalorder %s19, 1
      %p58 = por %p56, %p57
      %p59 = scmp.ne.s32.totalorder %s50, %s51
      %p60 = scmp.eq.s32.totalorder %s19, 0
      %p61 = por %p59, %p60
      %p62 = scmp.ne.s32.totalorder %s50, %s51
      %p63 = scmp.eq.s32.totalorder %s20, 1
      %p64 = por %p62, %p63
      %p66 = scmp.ne.s32.totalorder %s51, %s65
      %p67 = scmp.eq.s32.totalorder %s20, 0
      %p68 = por %p66, %p67
      %s70 = sadd.s32 %s69, 1
      %p73 = scmp.eq.s32.totalorder %s14, 1
      %p74 = scmp.ne.s32.totalorder %s69, %s71
      %p75 = scmp.eq.s32.totalorder %s14, 0
      %p76 = por %p74, %p75
      %p77 = scmp.ne.s32.totalorder %s69, %s71
      %p78 = scmp.eq.s32.totalorder %s19, 1
      %p79 = por %p77, %p78
      %p80 = scmp.ne.s32.totalorder %s71, %s72
      %p81 = scmp.eq.s32.totalorder %s19, 0
      %p82 = por %p80, %p81
      %p83 = scmp.ne.s32.totalorder %s71, %s72
      %p84 = scmp.eq.s32.totalorder %s20, 1
      %p85 = por %p83, %p84
      %p87 = scmp.ne.s32.totalorder %s72, %s86
      %p88 = scmp.eq.s32.totalorder %s20, 0
      %p89 = por %p87, %p88
      %s91 = sadd.s32 %s90, 1
      %p94 = scmp.eq.s32.totalorder %s14, 1
      %p95 = scmp.ne.s32.totalorder %s90, %s92
      %p96 = scmp.eq.s32.totalorder %s14, 0
      %p97 = por %p95, %p96
      %p98 = scmp.ne.s32.totalorder %s90, %s92
      %p99 = scmp.eq.s32.totalorder %s19, 1
      %p100 = por %p98, %p99
      %p101 = scmp.ne.s32.totalorder %s92, %s93
      %p102 = scmp.eq.s32.totalorder %s19, 0
      %p103 = por %p101, %p102
      %p104 = scmp.ne.s32.totalorder %s92, %s93
      %p105 = scmp.eq.s32.totalorder %s20, 1
      %p106 = por %p104, %p105
      %p108 = scmp.ne.s32.totalorder %s93, %s107
      %p109 = scmp.eq.s32.totalorder %s20, 0
      %p110 = por %p108, %p109
      %s112 = sadd.s32 %s111, 1
      %p115 = scmp.eq.s32.totalorder %s14, 1
      %p116 = scmp.ne.s32.totalorder %s111, %s113
      %p117 = scmp.eq.s32.totalorder %s14, 0
      %p118 = por %p116, %p117
      %p119 = scmp.ne.s32.totalorder %s111, %s113
      %p120 = scmp.eq.s32.totalorder %s19, 1
      %p121 = por %p119, %p120
      %p122 = scmp.ne.s32.totalorder %s113, %s114
      %p123 = scmp.eq.s32.totalorder %s19, 0
      %p124 = por %p122, %p123
      %p125 = scmp.ne.s32.totalorder %s113, %s114
      %p126 = scmp.eq.s32.totalorder %s20, 1
      %p127 = por %p125, %p126
      %p129 = scmp.ne.s32.totalorder %s114, %s128
      %p130 = scmp.eq.s32.totalorder %s20, 0
      %p131 = por %p129, %p130
      %s132 = ssub.s32 %s14, %s21
      %p133 = scmp.eq.s32.totalorder %s132, 0
      %s135 = sadd.s32 %s134, 1
      %s136 = scalar_select %p133, %s134, %s135
      %p139 = pneg %p133
      %p140 = scmp.eq.s32.totalorder %s14, 1
      %p141 = por %p139, %p140
      %p142 = scmp.ne.s32.totalorder %s134, %s137
      %p143 = scmp.eq.s32.totalorder %s14, 0
      %p144 = por %p142, %p143
      %p145 = scmp.ne.s32.totalorder %s134, %s137
      %p146 = scmp.eq.s32.totalorder %s19, 1
      %p147 = por %p145, %p146
      %p148 = scmp.ne.s32.totalorder %s137, %s138
      %p149 = scmp.eq.s32.totalorder %s19, 0
      %p150 = por %p148, %p149
      %p151 = scmp.ne.s32.totalorder %s137, %s138
      %p152 = scmp.eq.s32.totalorder %s20, 1
      %p153 = por %p151, %p152
      %p155 = scmp.ne.s32.totalorder %s138, %s154
      %p156 = scmp.eq.s32.totalorder %s20, 0
      %p157 = por %p155, %p156
      %p158 = scmp.le.s32.totalorder 1, %s14
      %p159 = scmp.lt.s32.totalorder %s14, 3
      %p160 = pnand %p158, %p159
      %p161 = pneg %p160
      // Predicated region
      $region9: #{down_forward.1} parent=5 // pred_check
        _
      $region10: #{down_forward.1} parent=5 // pred_check_branch
        %163 = sbr.rel (%p160) target = $region12
      $region11: #{down_forward.1} parent=5 // pred_region
        %s164 = ssub.s32 %s14, 1
        // Predicated region
        $region13: #{down_forward.1} parent=11 // pred_check
          %p165 = pneg %p61
        $region14: #{down_forward.1} parent=11 // pred_check_branch
          %167 = sbr.rel (%p165) target = $region16
        $region15: #{down_forward.1} parent=11 // pred_region
          _
        $region16: #{down_forward.1} parent=11 // pred_fallthru
          _
        // Predicated region
        $region17: #{down_forward.1} parent=11 // pred_check
          %p168 = pneg %p82
        $region18: #{down_forward.1} parent=11 // pred_check_branch
          %170 = sbr.rel (%p168) target = $region20
        $region19: #{down_forward.1} parent=11 // pred_region
          _
        $region20: #{down_forward.1} parent=11 // pred_fallthru
          _
        // Predicated region
        $region21: #{down_forward.1} parent=11 // pred_check
          %p171 = pneg %p103
        $region22: #{down_forward.1} parent=11 // pred_check_branch
          %173 = sbr.rel (%p171) target = $region24
        $region23: #{down_forward.1} parent=11 // pred_region
          _
        $region24: #{down_forward.1} parent=11 // pred_fallthru
          _
        // Predicated region
        $region25: #{down_forward.1} parent=11 // pred_check
          %p174 = pneg %p124
        $region26: #{down_forward.1} parent=11 // pred_check_branch
          %176 = sbr.rel (%p174) target = $region28
        $region27: #{down_forward.1} parent=11 // pred_region
          _
        $region28: #{down_forward.1} parent=11 // pred_fallthru
          _
      $region12: #{down_forward.1} parent=5 // pred_fallthru
        _
      %p177 = scmp.lt.s32.totalorder %s14, 2
      // Predicated region
      $region29: #{down_forward.1} parent=5 // pred_check
        %p178 = pneg %p177
      $region30: #{down_forward.1} parent=5 // pred_check_branch
        %180 = sbr.rel (%p178) target = $region32
      $region31: #{down_forward.1} parent=5 // pred_region
        // Predicated region
        $region33: #{down_forward.1} parent=31 // pred_check
          %p181 = pneg %p34
        $region34: #{down_forward.1} parent=31 // pred_check_branch
          %183 = sbr.rel (%p181) target = $region36
        $region35: #{down_forward.1} parent=31 // pred_region
          %p184 = scmp.lt.s32.totalorder %s14, 1
          %s185 = scalar_select %p184, %s14, 1
          %s186 = smul.addr %s185, 8
          %s187 = smul.addr %s186, 4
          %s188 = scalar_lea.vmem %s0, %s187
        $region36: #{down_forward.1} parent=31 // pred_fallthru
          _
      $region32: #{down_forward.1} parent=5 // pred_fallthru
        _
      %p189 = scmp.le.s32.totalorder 1, %s14
      %p190 = scmp.lt.s32.totalorder %s14, 3
      %p191 = pnand %p189, %p190
      %p192 = pneg %p191
      // Predicated region
      $region37: #{down_forward.1} parent=5 // pred_check
        _
      $region38: #{down_forward.1} parent=5 // pred_check_branch
        %194 = sbr.rel (%p191) target = $region40
      $region39: #{down_forward.1} parent=5 // pred_region
        %s195 = ssub.s32 %s14, 1
        %p196 = scmp.lt.s32.totalorder %s19, 1
        %s197 = scalar_select %p196, %s19, 1
        %s198 = smul.addr %s197, 8
        %s199 = smul.addr %s198, 4
        %s200 = scalar_lea.vmem %s0, %s199
        %p201 = pneg %p40
        %p202 = pneg %p37
        %p203 = pneg %p61
        %p204 = pneg %p58
        %p205 = pneg %p82
        %p206 = pneg %p79
        %p207 = pneg %p103
        %p208 = pneg %p100
        %p209 = pneg %p124
        %p210 = pneg %p121
        %p211 = pneg %p150
        %p212 = pneg %p147
        %s213 = sand.u32 %s137, 1
        %s214 = scalar_lea.sflag [#allocation5], %s213
        %s215 = sand.u32 %s137, 1
        %s216 = smul.addr %s215, 32
        %s217 = scalar_lea.vmem [#allocation4], %s216
        %p218 = scmp.lt.s32.totalorder %s19, 1
        %s219 = scalar_select %p218, %s19, 1
        %s220 = smul.addr %s219, 8
        %s221 = smul.addr %s220, 4
        %s222 = scalar_lea.vmem %s0, %s221
        %vm224 = vcmask 27648
        %225 = vst.msk [vmem:[#allocation2] sm:$0xf] %vm224, 0
        %vm226 = vcmask 24576
        %227 = vst.msk [vmem:[#allocation2 + $0x4] sm:$0x1] %vm226, 0
        %s228 = scalar_lea.vmem [#allocation2], 72
        %229 = vst.msk [vmem:[%s228] sm:$0xf] %vm224, 0
        %230 = vst.msk [vmem:[%s228 + $0x4] sm:$0x1] %vm226, 0
        %vm231 = vcmask 24576
        %vm232 = vsmask.f32 256
        %vm233 = vmand %vm231, %vm232
        %v234 = vld [vmem:[#allocation2] sm:$0x1]
        %v235 = vsel %vm233, 0, %v234
        %236 = vst [vmem:[#allocation2] sm:$0x1] %v235
        %v237 = vld [vmem:[#allocation2 + $0x8] sm:$0x1]
        %v238 = vsel %vm233, 0, %v237
        %239 = vst [vmem:[#allocation2 + $0x8] sm:$0x1] %v238
        %v240 = vld [vmem:[#allocation2 + $0x10] sm:$0x1]
        %v241 = vsel %vm233, 0, %v240
        %242 = vst [vmem:[#allocation2 + $0x10] sm:$0x1] %v241
        %v243 = vld [vmem:[#allocation2 + $0x18] sm:$0x1]
        %v244 = vsel %vm233, 0, %v243
        %245 = vst [vmem:[#allocation2 + $0x18] sm:$0x1] %v244
        %v246 = vld [vmem:[#allocation2 + $0x20] sm:$0x1]
        %v247 = vsel %vm233, 0, %v246
        %248 = vst [vmem:[#allocation2 + $0x20] sm:$0x1] %v247
        %v249 = vld [vmem:[#allocation2 + $0x28] sm:$0x1]
        %v250 = vsel %vm233, 0, %v249
        %251 = vst [vmem:[#allocation2 + $0x28] sm:$0x1] %v250
        %v252 = vld [vmem:[#allocation2 + $0x30] sm:$0x1]
        %v253 = vsel %vm233, 0, %v252
        %254 = vst [vmem:[#allocation2 + $0x30] sm:$0x1] %v253
        %v255 = vld [vmem:[#allocation2 + $0x38] sm:$0x1]
        %v256 = vsel %vm233, 0, %v255
        %257 = vst [vmem:[#allocation2 + $0x38] sm:$0x1] %v256
        %v258 = vld [vmem:[#allocation2 + $0x40] sm:$0x1]
        %v259 = vsel %vm233, 0, %v258
        %260 = vst [vmem:[#allocation2 + $0x40] sm:$0x1] %v259
        %v261 = vld [vmem:[#allocation2 + $0x48] sm:$0x1]
        %v262 = vsel %vm233, 0, %v261
        %263 = vst [vmem:[#allocation2 + $0x48] sm:$0x1] %v262
        %vm264 = vsmask.f32 7938
        %vm265 = vmand %vm231, %vm264
        %v266 = vld [vmem:[#allocation2 + $0x4] sm:$0x1]
        %v267 = vsel %vm265, 0, %v266
        %268 = vst [vmem:[#allocation2 + $0x4] sm:$0x1] %v267
        %v269 = vld [vmem:[#allocation2 + $0xc] sm:$0x1]
        %v270 = vsel %vm265, 0, %v269
        %271 = vst [vmem:[#allocation2 + $0xc] sm:$0x1] %v270
        %v272 = vld [vmem:[#allocation2 + $0x14] sm:$0x1]
        %v273 = vsel %vm265, 0, %v272
        %274 = vst [vmem:[#allocation2 + $0x14] sm:$0x1] %v273
        %v275 = vld [vmem:[#allocation2 + $0x1c] sm:$0x1]
        %v276 = vsel %vm265, 0, %v275
        %277 = vst [vmem:[#allocation2 + $0x1c] sm:$0x1] %v276
        %v278 = vld [vmem:[#allocation2 + $0x24] sm:$0x1]
        %v279 = vsel %vm265, 0, %v278
        %280 = vst [vmem:[#allocation2 + $0x24] sm:$0x1] %v279
        %v281 = vld [vmem:[#allocation2 + $0x2c] sm:$0x1]
        %v282 = vsel %vm265, 0, %v281
        %283 = vst [vmem:[#allocation2 + $0x2c] sm:$0x1] %v282
        %v284 = vld [vmem:[#allocation2 + $0x34] sm:$0x1]
        %v285 = vsel %vm265, 0, %v284
        %286 = vst [vmem:[#allocation2 + $0x34] sm:$0x1] %v285
        %v287 = vld [vmem:[#allocation2 + $0x3c] sm:$0x1]
        %v288 = vsel %vm265, 0, %v287
        %289 = vst [vmem:[#allocation2 + $0x3c] sm:$0x1] %v288
        %v290 = vld [vmem:[#allocation2 + $0x44] sm:$0x1]
        %v291 = vsel %vm265, 0, %v290
        %292 = vst [vmem:[#allocation2 + $0x44] sm:$0x1] %v291
        %v293 = vld [vmem:[#allocation2 + $0x4c] sm:$0x1]
        %v294 = vsel %vm265, 0, %v293
        %295 = vst [vmem:[#allocation2 + $0x4c] sm:$0x1] %v294
        %vm296 = vcmask 60416
        %297 = vst.msk [vmem:[#allocation3] sm:$0xf] %vm296, 0
        %vm298 = vcmask 57344
        %299 = vst.msk [vmem:[#allocation3 + $0x4] sm:$0x1] %vm298, 0
        %s300 = scalar_lea.vmem [#allocation3], 72
        %301 = vst.msk [vmem:[%s300] sm:$0xf] %vm296, 0
        %302 = vst.msk [vmem:[%s300 + $0x4] sm:$0x1] %vm298, 0
        %vm303 = vcmask 57344
        %vm304 = vmand %vm303, %vm232
        %v305 = vld [vmem:[#allocation3] sm:$0x1]
        %v306 = vsel %vm304, 0, %v305
        %307 = vst [vmem:[#allocation3] sm:$0x1] %v306
        %v308 = vld [vmem:[#allocation3 + $0x8] sm:$0x1]
        %v309 = vsel %vm304, 0, %v308
        %310 = vst [vmem:[#allocation3 + $0x8] sm:$0x1] %v309
        %v311 = vld [vmem:[#allocation3 + $0x10] sm:$0x1]
        %v312 = vsel %vm304, 0, %v311
        %313 = vst [vmem:[#allocation3 + $0x10] sm:$0x1] %v312
        %v314 = vld [vmem:[#allocation3 + $0x18] sm:$0x1]
        %v315 = vsel %vm304, 0, %v314
        %316 = vst [vmem:[#allocation3 + $0x18] sm:$0x1] %v315
        %v317 = vld [vmem:[#allocation3 + $0x20] sm:$0x1]
        %v318 = vsel %vm304, 0, %v317
        %319 = vst [vmem:[#allocation3 + $0x20] sm:$0x1] %v318
        %v320 = vld [vmem:[#allocation3 + $0x28] sm:$0x1]
        %v321 = vsel %vm304, 0, %v320
        %322 = vst [vmem:[#allocation3 + $0x28] sm:$0x1] %v321
        %v323 = vld [vmem:[#allocation3 + $0x30] sm:$0x1]
        %v324 = vsel %vm304, 0, %v323
        %325 = vst [vmem:[#allocation3 + $0x30] sm:$0x1] %v324
        %v326 = vld [vmem:[#allocation3 + $0x38] sm:$0x1]
        %v327 = vsel %vm304, 0, %v326
        %328 = vst [vmem:[#allocation3 + $0x38] sm:$0x1] %v327
        %v329 = vld [vmem:[#allocation3 + $0x40] sm:$0x1]
        %v330 = vsel %vm304, 0, %v329
        %331 = vst [vmem:[#allocation3 + $0x40] sm:$0x1] %v330
        %v332 = vld [vmem:[#allocation3 + $0x48] sm:$0x1]
        %v333 = vsel %vm304, 0, %v332
        %334 = vst [vmem:[#allocation3 + $0x48] sm:$0x1] %v333
        %vm335 = vmand %vm303, %vm264
        %v336 = vld [vmem:[#allocation3 + $0x4] sm:$0x1]
        %v337 = vsel %vm335, 0, %v336
        %338 = vst [vmem:[#allocation3 + $0x4] sm:$0x1] %v337
        %v339 = vld [vmem:[#allocation3 + $0xc] sm:$0x1]
        %v340 = vsel %vm335, 0, %v339
        %341 = vst [vmem:[#allocation3 + $0xc] sm:$0x1] %v340
        %v342 = vld [vmem:[#allocation3 + $0x14] sm:$0x1]
        %v343 = vsel %vm335, 0, %v342
        %344 = vst [vmem:[#allocation3 + $0x14] sm:$0x1] %v343
        %v345 = vld [vmem:[#allocation3 + $0x1c] sm:$0x1]
        %v346 = vsel %vm335, 0, %v345
        %347 = vst [vmem:[#allocation3 + $0x1c] sm:$0x1] %v346
        %v348 = vld [vmem:[#allocation3 + $0x24] sm:$0x1]
        %v349 = vsel %vm335, 0, %v348
        %350 = vst [vmem:[#allocation3 + $0x24] sm:$0x1] %v349
        %v351 = vld [vmem:[#allocation3 + $0x2c] sm:$0x1]
        %v352 = vsel %vm335, 0, %v351
        %353 = vst [vmem:[#allocation3 + $0x2c] sm:$0x1] %v352
        %v354 = vld [vmem:[#allocation3 + $0x34] sm:$0x1]
        %v355 = vsel %vm335, 0, %v354
        %356 = vst [vmem:[#allocation3 + $0x34] sm:$0x1] %v355
        %v357 = vld [vmem:[#allocation3 + $0x3c] sm:$0x1]
        %v358 = vsel %vm335, 0, %v357
        %359 = vst [vmem:[#allocation3 + $0x3c] sm:$0x1] %v358
        %v360 = vld [vmem:[#allocation3 + $0x44] sm:$0x1]
        %v361 = vsel %vm335, 0, %v360
        %362 = vst [vmem:[#allocation3 + $0x44] sm:$0x1] %v361
        %v363 = vld [vmem:[#allocation3 + $0x4c] sm:$0x1]
        %v364 = vsel %vm335, 0, %v363
        %365 = vst [vmem:[#allocation3 + $0x4c] sm:$0x1] %v364
        %v366 = vld [vmem:[%s222] sm:$0xf]
        %v367 = vld [vmem:[%s222 + $0x4] sm:$0xf]
        %v368 = vld [vmem:[%s222 + $0x8] sm:$0xf]
        %v369 = vld [vmem:[%s222 + $0xc] sm:$0xf]
        %v370 = vld [vmem:[%s222 + $0x10] sm:$0xf]
        %v371 = vld [vmem:[%s222 + $0x14] sm:$0xf]
        %v372 = vld [vmem:[%s222 + $0x18] sm:$0xf]
        %v373 = vld [vmem:[%s222 + $0x1c] sm:$0xf]
        %v375 = vshrl.u32 %v366, 16
        %v377 = vrot.slane %v375, 7
        %v378 = vshll.u32 %v366, 16
        %v380 = vor.u32 %v377, %v378
        %v381 = vrot.slane %v377, 4
        %v383 = vshrl.u32 %v367, 16
        %v385 = vrot.slane %v383, 7
        %v386 = vshll.u32 %v367, 16
        %v388 = vor.u32 %v385, %v386
        %v389 = vrot.slane %v385, 4
        %v391 = vshrl.u32 %v368, 16
        %v393 = vrot.slane %v391, 7
        %v394 = vshll.u32 %v368, 16
        %v396 = vor.u32 %v393, %v394
        %v397 = vrot.slane %v393, 4
        %v399 = vshrl.u32 %v369, 16
        %v401 = vrot.slane %v399, 7
        %v402 = vshll.u32 %v369, 16
        %v404 = vor.u32 %v401, %v402
        %v405 = vrot.slane %v401, 4
        %v407 = vshrl.u32 %v370, 16
        %v409 = vrot.slane %v407, 7
        %v410 = vshll.u32 %v370, 16
        %v412 = vor.u32 %v409, %v410
        %v413 = vrot.slane %v409, 4
        %v415 = vshrl.u32 %v371, 16
        %v417 = vrot.slane %v415, 7
        %v418 = vshll.u32 %v371, 16
        %v420 = vor.u32 %v417, %v418
        %v421 = vrot.slane %v417, 4
        %v423 = vshrl.u32 %v372, 16
        %v425 = vrot.slane %v423, 7
        %v426 = vshll.u32 %v372, 16
        %v428 = vor.u32 %v425, %v426
        %v429 = vrot.slane %v425, 4
        %v431 = vshrl.u32 %v373, 16
        %v433 = vrot.slane %v431, 7
        %v434 = vshll.u32 %v373, 16
        %v436 = vor.u32 %v433, %v434
        %v437 = vrot.slane %v433, 4
        %s454 = scalar_lea.vmem [#allocation2], 8
        %vm455 = vcmask 27648
        %vm456 = vmand %vm455, %vm264
        %v457 = vld [vmem:[%s454] sm:$0xf]
        %v458 = vsel %vm456, %v380, %v457
        %459 = vst [vmem:[%s454] sm:$0xf] %v458
        %v460 = vld [vmem:[%s454 + $0x4] sm:$0x1]
        %v461 = vsel %vm233, %v381, %v460
        %462 = vst [vmem:[%s454 + $0x4] sm:$0x1] %v461
        %v463 = vld [vmem:[%s454 + $0x8] sm:$0xf]
        %v464 = vsel %vm456, %v388, %v463
        %465 = vst [vmem:[%s454 + $0x8] sm:$0xf] %v464
        %v466 = vld [vmem:[%s454 + $0xc] sm:$0x1]
        %v467 = vsel %vm233, %v389, %v466
        %468 = vst [vmem:[%s454 + $0xc] sm:$0x1] %v467
        %v469 = vld [vmem:[%s454 + $0x10] sm:$0xf]
        %v470 = vsel %vm456, %v396, %v469
        %471 = vst [vmem:[%s454 + $0x10] sm:$0xf] %v470
        %v472 = vld [vmem:[%s454 + $0x14] sm:$0x1]
        %v473 = vsel %vm233, %v397, %v472
        %474 = vst [vmem:[%s454 + $0x14] sm:$0x1] %v473
        %v475 = vld [vmem:[%s454 + $0x18] sm:$0xf]
        %v476 = vsel %vm456, %v404, %v475
        %477 = vst [vmem:[%s454 + $0x18] sm:$0xf] %v476
        %v478 = vld [vmem:[%s454 + $0x1c] sm:$0x1]
        %v479 = vsel %vm233, %v405, %v478
        %480 = vst [vmem:[%s454 + $0x1c] sm:$0x1] %v479
        %v481 = vld [vmem:[%s454 + $0x20] sm:$0xf]
        %v482 = vsel %vm456, %v412, %v481
        %483 = vst [vmem:[%s454 + $0x20] sm:$0xf] %v482
        %v484 = vld [vmem:[%s454 + $0x24] sm:$0x1]
        %v485 = vsel %vm233, %v413, %v484
        %486 = vst [vmem:[%s454 + $0x24] sm:$0x1] %v485
        %v487 = vld [vmem:[%s454 + $0x28] sm:$0xf]
        %v488 = vsel %vm456, %v420, %v487
        %489 = vst [vmem:[%s454 + $0x28] sm:$0xf] %v488
        %v490 = vld [vmem:[%s454 + $0x2c] sm:$0x1]
        %v491 = vsel %vm233, %v421, %v490
        %492 = vst [vmem:[%s454 + $0x2c] sm:$0x1] %v491
        %v493 = vld [vmem:[%s454 + $0x30] sm:$0xf]
        %v494 = vsel %vm456, %v428, %v493
        %495 = vst [vmem:[%s454 + $0x30] sm:$0xf] %v494
        %v496 = vld [vmem:[%s454 + $0x34] sm:$0x1]
        %v497 = vsel %vm233, %v429, %v496
        %498 = vst [vmem:[%s454 + $0x34] sm:$0x1] %v497
        %v499 = vld [vmem:[%s454 + $0x38] sm:$0xf]
        %v500 = vsel %vm456, %v436, %v499
        %501 = vst [vmem:[%s454 + $0x38] sm:$0xf] %v500
        %v502 = vld [vmem:[%s454 + $0x3c] sm:$0x1]
        %v503 = vsel %vm233, %v437, %v502
        %504 = vst [vmem:[%s454 + $0x3c] sm:$0x1] %v503
        %v505 = vld [vmem:[#allocation2] sm:$0xf]
        %v506 = vld [vmem:[#allocation2 + $0x8] sm:$0xf]
        %v507 = vld [vmem:[#allocation2 + $0x10] sm:$0xf]
        %v508 = vld [vmem:[#allocation2 + $0x18] sm:$0xf]
        %v509 = vld [vmem:[#allocation2 + $0x20] sm:$0xf]
        %v510 = vld [vmem:[#allocation2 + $0x28] sm:$0xf]
        %v511 = vld [vmem:[#allocation2 + $0x30] sm:$0xf]
        %v512 = vld [vmem:[#allocation2 + $0x38] sm:$0xf]
        %v513 = vld [vmem:[#allocation2 + $0x4] sm:$0x1]
        %v514 = vld [vmem:[#allocation2 + $0xc] sm:$0x1]
        %v515 = vld [vmem:[#allocation2 + $0x14] sm:$0x1]
        %v516 = vld [vmem:[#allocation2 + $0x1c] sm:$0x1]
        %v517 = vld [vmem:[#allocation2 + $0x24] sm:$0x1]
        %v518 = vld [vmem:[#allocation2 + $0x2c] sm:$0x1]
        %v519 = vld [vmem:[#allocation2 + $0x34] sm:$0x1]
        %v520 = vld [vmem:[#allocation2 + $0x3c] sm:$0x1]
        %v521 = vld [vmem:[#allocation2] sm:$0xe]
        %v522 = vld [vmem:[#allocation2 + $0x8] sm:$0xe]
        %v523 = vld [vmem:[#allocation2 + $0x10] sm:$0xe]
        %v524 = vld [vmem:[#allocation2 + $0x18] sm:$0xe]
        %v525 = vld [vmem:[#allocation2 + $0x20] sm:$0xe]
        %v526 = vld [vmem:[#allocation2 + $0x28] sm:$0xe]
        %v527 = vld [vmem:[#allocation2 + $0x30] sm:$0xe]
        %v528 = vld [vmem:[#allocation2 + $0x38] sm:$0xe]
        %v545 = vunpack.c.l.b16 %v505
        %v546 = vunpack.c.l.b16 %v513
        %v547 = vunpack.c.l.b16 %v506
        %v548 = vunpack.c.l.b16 %v514
        %v549 = vunpack.c.l.b16 %v507
        %v550 = vunpack.c.l.b16 %v515
        %v551 = vunpack.c.l.b16 %v508
        %v552 = vunpack.c.l.b16 %v516
        %v553 = vunpack.c.l.b16 %v509
        %v554 = vunpack.c.l.b16 %v517
        %v555 = vunpack.c.l.b16 %v510
        %v556 = vunpack.c.l.b16 %v518
        %v557 = vunpack.c.l.b16 %v511
        %v558 = vunpack.c.l.b16 %v519
        %v559 = vunpack.c.l.b16 %v512
        %v560 = vunpack.c.l.b16 %v520
        %v561 = vpack.c.b16 %v546, %v545
        %v562 = vpack.c.b16 %v548, %v547
        %v563 = vpack.c.b16 %v550, %v549
        %v564 = vpack.c.b16 %v552, %v551
        %v565 = vpack.c.b16 %v554, %v553
        %v566 = vpack.c.b16 %v556, %v555
        %v567 = vpack.c.b16 %v558, %v557
        %v568 = vpack.c.b16 %v560, %v559
        %v570 = vshrl.u32 %v561, 16
        %v572 = vshll.u32 %v561, 16
        %v574 = vrot.slane %v572, 1
        %v575 = vor.u32 %v570, %v574
        %v577 = vshrl.u32 %v562, 16
        %v579 = vshll.u32 %v562, 16
        %v581 = vrot.slane %v579, 1
        %v582 = vor.u32 %v577, %v581
        %v584 = vshrl.u32 %v563, 16
        %v586 = vshll.u32 %v563, 16
        %v588 = vrot.slane %v586, 1
        %v589 = vor.u32 %v584, %v588
        %v591 = vshrl.u32 %v564, 16
        %v593 = vshll.u32 %v564, 16
        %v595 = vrot.slane %v593, 1
        %v596 = vor.u32 %v591, %v595
        %v598 = vshrl.u32 %v565, 16
        %v600 = vshll.u32 %v565, 16
        %v602 = vrot.slane %v600, 1
        %v603 = vor.u32 %v598, %v602
        %v605 = vshrl.u32 %v566, 16
        %v607 = vshll.u32 %v566, 16
        %v609 = vrot.slane %v607, 1
        %v610 = vor.u32 %v605, %v609
        %v612 = vshrl.u32 %v567, 16
        %v614 = vshll.u32 %v567, 16
        %v616 = vrot.slane %v614, 1
        %v617 = vor.u32 %v612, %v616
        %v619 = vshrl.u32 %v568, 16
        %v621 = vshll.u32 %v568, 16
        %v623 = vrot.slane %v621, 1
        %v624 = vor.u32 %v619, %v623
        %625 = vrot.lane.b32.xlu0 %v575, 4
        %v626 = vpop.permute.xlu0 %625
        %627 = vrot.lane.b32.xlu0 %v582, 4
        %v628 = vpop.permute.xlu0 %627
        %629 = vrot.lane.b32.xlu0 %v589, 4
        %v630 = vpop.permute.xlu0 %629
        %631 = vrot.lane.b32.xlu0 %v596, 4
        %v632 = vpop.permute.xlu0 %631
        %633 = vrot.lane.b32.xlu0 %v603, 4
        %v634 = vpop.permute.xlu0 %633
        %635 = vrot.lane.b32.xlu0 %v610, 4
        %v636 = vpop.permute.xlu0 %635
        %637 = vrot.lane.b32.xlu0 %v617, 4
        %v638 = vpop.permute.xlu0 %637
        %639 = vrot.lane.b32.xlu0 %v624, 4
        %v640 = vpop.permute.xlu0 %639
        %v649 = vunpack.c.l.b16 %v521
        %v650 = vunpack.c.l.b16 %v522
        %v651 = vunpack.c.l.b16 %v523
        %v652 = vunpack.c.l.b16 %v524
        %v653 = vunpack.c.l.b16 %v525
        %v654 = vunpack.c.l.b16 %v526
        %v655 = vunpack.c.l.b16 %v527
        %v656 = vunpack.c.l.b16 %v528
        %v657 = vpack.c.b16 %v546, %v649
        %v658 = vpack.c.b16 %v548, %v650
        %v659 = vpack.c.b16 %v550, %v651
        %v660 = vpack.c.b16 %v552, %v652
        %v661 = vpack.c.b16 %v554, %v653
        %v662 = vpack.c.b16 %v556, %v654
        %v663 = vpack.c.b16 %v558, %v655
        %v664 = vpack.c.b16 %v560, %v656
        %v665 = vrot.slane %v657, 1
        %v666 = vrot.slane %v658, 1
        %v667 = vrot.slane %v659, 1
        %v668 = vrot.slane %v660, 1
        %v669 = vrot.slane %v661, 1
        %v670 = vrot.slane %v662, 1
        %v671 = vrot.slane %v663, 1
        %v672 = vrot.slane %v664, 1
        %673 = vrot.lane.b32.xlu0 %v665, 8
        %v674 = vpop.permute.xlu0 %673
        %675 = vrot.lane.b32.xlu0 %v666, 8
        %v676 = vpop.permute.xlu0 %675
        %677 = vrot.lane.b32.xlu0 %v667, 8
        %v678 = vpop.permute.xlu0 %677
        %679 = vrot.lane.b32.xlu0 %v668, 8
        %v680 = vpop.permute.xlu0 %679
        %681 = vrot.lane.b32.xlu0 %v669, 8
        %v682 = vpop.permute.xlu0 %681
        %683 = vrot.lane.b32.xlu0 %v670, 8
        %v684 = vpop.permute.xlu0 %683
        %685 = vrot.lane.b32.xlu0 %v671, 8
        %v686 = vpop.permute.xlu0 %685
        %687 = vrot.lane.b32.xlu0 %v672, 8
        %v688 = vpop.permute.xlu0 %687
        %vm689 = vcmask 31744
        %v692 = vsel %vm689, %v505, %v626
        %v695 = vsel %vm689, %v506, %v628
        %v698 = vsel %vm689, %v507, %v630
        %v701 = vsel %vm689, %v508, %v632
        %v704 = vsel %vm689, %v509, %v634
        %v707 = vsel %vm689, %v510, %v636
        %v710 = vsel %vm689, %v511, %v638
        %v713 = vsel %vm689, %v512, %v640
        %vm714 = vcmask 64512
        %v716 = vsel %vm714, %v692, %v674
        %v718 = vsel %vm714, %v695, %v676
        %v720 = vsel %vm714, %v698, %v678
        %v722 = vsel %vm714, %v701, %v680
        %v724 = vsel %vm714, %v704, %v682
        %v726 = vsel %vm714, %v707, %v684
        %v728 = vsel %vm714, %v710, %v686
        %v730 = vsel %vm714, %v713, %v688
        %v731 = vld [vmem:[%s1] sm:$0xf]
        %v732 = vld [vmem:[%s1 + $0x4] sm:$0x3]
        %v733 = vld [vmem:[%s454] sm:$0xf]
        %v734 = vld [vmem:[%s454 + $0x8] sm:$0xf]
        %v735 = vld [vmem:[%s454 + $0x10] sm:$0xf]
        %v736 = vld [vmem:[%s454 + $0x18] sm:$0xf]
        %v737 = vld [vmem:[%s454 + $0x20] sm:$0xf]
        %v738 = vld [vmem:[%s454 + $0x28] sm:$0xf]
        %v739 = vld [vmem:[%s454 + $0x30] sm:$0xf]
        %v740 = vld [vmem:[%s454 + $0x38] sm:$0xf]
        %v741 = vld [vmem:[%s454 + $0x4] sm:$0x1]
        %v742 = vld [vmem:[%s454 + $0xc] sm:$0x1]
        %v743 = vld [vmem:[%s454 + $0x14] sm:$0x1]
        %v744 = vld [vmem:[%s454 + $0x1c] sm:$0x1]
        %v745 = vld [vmem:[%s454 + $0x24] sm:$0x1]
        %v746 = vld [vmem:[%s454 + $0x2c] sm:$0x1]
        %v747 = vld [vmem:[%s454 + $0x34] sm:$0x1]
        %v748 = vld [vmem:[%s454 + $0x3c] sm:$0x1]
        %v749 = vld [vmem:[%s454] sm:$0xe]
        %v750 = vld [vmem:[%s454 + $0x8] sm:$0xe]
        %v751 = vld [vmem:[%s454 + $0x10] sm:$0xe]
        %v752 = vld [vmem:[%s454 + $0x18] sm:$0xe]
        %v753 = vld [vmem:[%s454 + $0x20] sm:$0xe]
        %v754 = vld [vmem:[%s454 + $0x28] sm:$0xe]
        %v755 = vld [vmem:[%s454 + $0x30] sm:$0xe]
        %v756 = vld [vmem:[%s454 + $0x38] sm:$0xe]
        %v773 = vunpack.c.l.b16 %v733
        %v774 = vunpack.c.l.b16 %v741
        %v775 = vunpack.c.l.b16 %v734
        %v776 = vunpack.c.l.b16 %v742
        %v777 = vunpack.c.l.b16 %v735
        %v778 = vunpack.c.l.b16 %v743
        %v779 = vunpack.c.l.b16 %v736
        %v780 = vunpack.c.l.b16 %v744
        %v781 = vunpack.c.l.b16 %v737
        %v782 = vunpack.c.l.b16 %v745
        %v783 = vunpack.c.l.b16 %v738
        %v784 = vunpack.c.l.b16 %v746
        %v785 = vunpack.c.l.b16 %v739
        %v786 = vunpack.c.l.b16 %v747
        %v787 = vunpack.c.l.b16 %v740
        %v788 = vunpack.c.l.b16 %v748
        %v789 = vpack.c.b16 %v774, %v773
        %v790 = vpack.c.b16 %v776, %v775
        %v791 = vpack.c.b16 %v778, %v777
        %v792 = vpack.c.b16 %v780, %v779
        %v793 = vpack.c.b16 %v782, %v781
        %v794 = vpack.c.b16 %v784, %v783
        %v795 = vpack.c.b16 %v786, %v785
        %v796 = vpack.c.b16 %v788, %v787
        %v798 = vshrl.u32 %v789, 16
        %v800 = vshll.u32 %v789, 16
        %v802 = vrot.slane %v800, 1
        %v803 = vor.u32 %v798, %v802
        %v805 = vshrl.u32 %v790, 16
        %v807 = vshll.u32 %v790, 16
        %v809 = vrot.slane %v807, 1
        %v810 = vor.u32 %v805, %v809
        %v812 = vshrl.u32 %v791, 16
        %v814 = vshll.u32 %v791, 16
        %v816 = vrot.slane %v814, 1
        %v817 = vor.u32 %v812, %v816
        %v819 = vshrl.u32 %v792, 16
        %v821 = vshll.u32 %v792, 16
        %v823 = vrot.slane %v821, 1
        %v824 = vor.u32 %v819, %v823
        %v826 = vshrl.u32 %v793, 16
        %v828 = vshll.u32 %v793, 16
        %v830 = vrot.slane %v828, 1
        %v831 = vor.u32 %v826, %v830
        %v833 = vshrl.u32 %v794, 16
        %v835 = vshll.u32 %v794, 16
        %v837 = vrot.slane %v835, 1
        %v838 = vor.u32 %v833, %v837
        %v840 = vshrl.u32 %v795, 16
        %v842 = vshll.u32 %v795, 16
        %v844 = vrot.slane %v842, 1
        %v845 = vor.u32 %v840, %v844
        %v847 = vshrl.u32 %v796, 16
        %v849 = vshll.u32 %v796, 16
        %v851 = vrot.slane %v849, 1
        %v852 = vor.u32 %v847, %v851
        %853 = vrot.lane.b32.xlu0 %v803, 4
        %v854 = vpop.permute.xlu0 %853
        %855 = vrot.lane.b32.xlu0 %v810, 4
        %v856 = vpop.permute.xlu0 %855
        %857 = vrot.lane.b32.xlu0 %v817, 4
        %v858 = vpop.permute.xlu0 %857
        %859 = vrot.lane.b32.xlu0 %v824, 4
        %v860 = vpop.permute.xlu0 %859
        %861 = vrot.lane.b32.xlu0 %v831, 4
        %v862 = vpop.permute.xlu0 %861
        %863 = vrot.lane.b32.xlu0 %v838, 4
        %v864 = vpop.permute.xlu0 %863
        %865 = vrot.lane.b32.xlu0 %v845, 4
        %v866 = vpop.permute.xlu0 %865
        %867 = vrot.lane.b32.xlu0 %v852, 4
        %v868 = vpop.permute.xlu0 %867
        %v877 = vunpack.c.l.b16 %v749
        %v878 = vunpack.c.l.b16 %v750
        %v879 = vunpack.c.l.b16 %v751
        %v880 = vunpack.c.l.b16 %v752
        %v881 = vunpack.c.l.b16 %v753
        %v882 = vunpack.c.l.b16 %v754
        %v883 = vunpack.c.l.b16 %v755
        %v884 = vunpack.c.l.b16 %v756
        %v885 = vpack.c.b16 %v774, %v877
        %v886 = vpack.c.b16 %v776, %v878
        %v887 = vpack.c.b16 %v778, %v879
        %v888 = vpack.c.b16 %v780, %v880
        %v889 = vpack.c.b16 %v782, %v881
        %v890 = vpack.c.b16 %v784, %v882
        %v891 = vpack.c.b16 %v786, %v883
        %v892 = vpack.c.b16 %v788, %v884
        %v893 = vrot.slane %v885, 1
        %v894 = vrot.slane %v886, 1
        %v895 = vrot.slane %v887, 1
        %v896 = vrot.slane %v888, 1
        %v897 = vrot.slane %v889, 1
        %v898 = vrot.slane %v890, 1
        %v899 = vrot.slane %v891, 1
        %v900 = vrot.slane %v892, 1
        %901 = vrot.lane.b32.xlu0 %v893, 8
        %v902 = vpop.permute.xlu0 %901
        %903 = vrot.lane.b32.xlu0 %v894, 8
        %v904 = vpop.permute.xlu0 %903
        %905 = vrot.lane.b32.xlu0 %v895, 8
        %v906 = vpop.permute.xlu0 %905
        %907 = vrot.lane.b32.xlu0 %v896, 8
        %v908 = vpop.permute.xlu0 %907
        %909 = vrot.lane.b32.xlu0 %v897, 8
        %v910 = vpop.permute.xlu0 %909
        %911 = vrot.lane.b32.xlu0 %v898, 8
        %v912 = vpop.permute.xlu0 %911
        %913 = vrot.lane.b32.xlu0 %v899, 8
        %v914 = vpop.permute.xlu0 %913
        %915 = vrot.lane.b32.xlu0 %v900, 8
        %v916 = vpop.permute.xlu0 %915
        %v919 = vsel %vm689, %v733, %v854
        %v922 = vsel %vm689, %v734, %v856
        %v925 = vsel %vm689, %v735, %v858
        %v928 = vsel %vm689, %v736, %v860
        %v931 = vsel %vm689, %v737, %v862
        %v934 = vsel %vm689, %v738, %v864
        %v937 = vsel %vm689, %v739, %v866
        %v940 = vsel %vm689, %v740, %v868
        %v942 = vsel %vm714, %v919, %v902
        %v944 = vsel %vm714, %v922, %v904
        %v946 = vsel %vm714, %v925, %v906
        %v948 = vsel %vm714, %v928, %v908
        %v950 = vsel %vm714, %v931, %v910
        %v952 = vsel %vm714, %v934, %v912
        %v954 = vsel %vm714, %v937, %v914
        %v956 = vsel %vm714, %v940, %v916
        %s957 = scalar_lea.vmem %s1, 8
        %v958 = vld [vmem:[%s957] sm:$0xf]
        %v959 = vld [vmem:[%s957 + $0x4] sm:$0x3]
        %v968 = vunpack.c.l.b16 %v942
        %v969 = vunpack.c.l.b16 %v944
        %v970 = vunpack.c.l.b16 %v946
        %v971 = vunpack.c.l.b16 %v948
        %v972 = vunpack.c.l.b16 %v950
        %v973 = vunpack.c.l.b16 %v952
        %v974 = vunpack.c.l.b16 %v954
        %v975 = vunpack.c.l.b16 %v956
        %v976 = vpack.c.b16 %v969, %v968
        %v977 = vpack.c.b16 %v971, %v970
        %v978 = vpack.c.b16 %v973, %v972
        %v979 = vpack.c.b16 %v975, %v974
        %v982 = vunpack.c.l.b16 %v958
        %v983 = vunpack.c.l.b16 %v959
        %v984 = vpack.c.b16 %v983, %v982
        %vm985 = vcmask 97280
        %v987 = vsel %vm985, %v976, 0
        %v990 = vsel %vm985, %v977, 0
        %v993 = vsel %vm985, %v978, 0
        %v996 = vsel %vm985, %v979, 0
        %vm998 = vcmask 1045504
        %v1000 = vsel %vm998, %v984, 0
        %1002 = vmatpush.bf16.msra.mxu0 0
        %1003 = vmatpush.bf16.msra.mxu0 0
        %1004 = vmatpush.bf16.msra.mxu0 0
        %1005 = vmatpush.bf16.msra.mxu0 0
        %1006 = vmatpush.bf16.msra.mxu0 0
        %1007 = vmatpush.bf16.msra.mxu0 0
        %1008 = vmatpush.bf16.msra.mxu0 0
        %1009 = vmatpush.bf16.msra.mxu0 %v1000
        %1010 = vmatmul.bf16.gmra.mxu0 %v987
        %v1011 = vpop.f32.mrf.mxu0
        %v1012 = vadd.f32 0.0, %v1011
        %v1013 = vpop.f32.mrf.mxu0
        %v1014 = vadd.f32 0.0, %v1013
        %1015 = vmatmul.bf16.gmra.mxu0 %v990
        %v1016 = vpop.f32.mrf.mxu0
        %v1017 = vadd.f32 0.0, %v1016
        %v1018 = vpop.f32.mrf.mxu0
        %v1019 = vadd.f32 0.0, %v1018
        %1020 = vmatmul.bf16.gmra.mxu0 %v993
        %v1021 = vpop.f32.mrf.mxu0
        %v1022 = vadd.f32 0.0, %v1021
        %v1023 = vpop.f32.mrf.mxu0
        %v1024 = vadd.f32 0.0, %v1023
        %1025 = vmatmul.bf16.gmra.mxu0 %v996
        %v1026 = vpop.f32.mrf.mxu0
        %v1027 = vadd.f32 0.0, %v1026
        %v1028 = vpop.f32.mrf.mxu0
        %v1029 = vadd.f32 0.0, %v1028
        %1030 = vdwg.mxu0
        %v1039 = vunpack.c.l.b16 %v716
        %v1040 = vunpack.c.l.b16 %v718
        %v1041 = vunpack.c.l.b16 %v720
        %v1042 = vunpack.c.l.b16 %v722
        %v1043 = vunpack.c.l.b16 %v724
        %v1044 = vunpack.c.l.b16 %v726
        %v1045 = vunpack.c.l.b16 %v728
        %v1046 = vunpack.c.l.b16 %v730
        %v1047 = vpack.c.b16 %v1040, %v1039
        %v1048 = vpack.c.b16 %v1042, %v1041
        %v1049 = vpack.c.b16 %v1044, %v1043
        %v1050 = vpack.c.b16 %v1046, %v1045
        %v1053 = vunpack.c.l.b16 %v731
        %v1054 = vunpack.c.l.b16 %v732
        %v1055 = vpack.c.b16 %v1054, %v1053
        %v1057 = vsel %vm985, %v1047, 0
        %v1060 = vsel %vm985, %v1048, 0
        %v1063 = vsel %vm985, %v1049, 0
        %v1066 = vsel %vm985, %v1050, 0
        %v1069 = vsel %vm998, %v1055, 0
        %1071 = vmatpush.bf16.msra.mxu0 0
        %1072 = vmatpush.bf16.msra.mxu0 0
        %1073 = vmatpush.bf16.msra.mxu0 0
        %1074 = vmatpush.bf16.msra.mxu0 0
        %1075 = vmatpush.bf16.msra.mxu0 0
        %1076 = vmatpush.bf16.msra.mxu0 0
        %1077 = vmatpush.bf16.msra.mxu0 0
        %1078 = vmatpush.bf16.msra.mxu0 %v1069
        %1079 = vmatmul.bf16.gmra.mxu0 %v1057
        %v1080 = vpop.f32.mrf.mxu0
        %v1081 = vadd.f32 %v1012, %v1080
        %v1082 = vpop.f32.mrf.mxu0
        %v1083 = vadd.f32 %v1014, %v1082
        %1084 = vmatmul.bf16.gmra.mxu0 %v1060
        %v1085 = vpop.f32.mrf.mxu0
        %v1086 = vadd.f32 %v1017, %v1085
        %v1087 = vpop.f32.mrf.mxu0
        %v1088 = vadd.f32 %v1019, %v1087
        %1089 = vmatmul.bf16.gmra.mxu0 %v1063
        %v1090 = vpop.f32.mrf.mxu0
        %v1091 = vadd.f32 %v1022, %v1090
        %v1092 = vpop.f32.mrf.mxu0
        %v1093 = vadd.f32 %v1024, %v1092
        %1094 = vmatmul.bf16.gmra.mxu0 %v1066
        %v1095 = vpop.f32.mrf.mxu0
        %v1096 = vadd.f32 %v1027, %v1095
        %v1097 = vpop.f32.mrf.mxu0
        %v1098 = vadd.f32 %v1029, %v1097
        %1099 = vdwg.mxu0
        %s1100 = scalar_lea.vmem [#allocation2], 16
        %v1101 = vld [vmem:[%s1100] sm:$0xf]
        %v1102 = vld [vmem:[%s1100 + $0x8] sm:$0xf]
        %v1103 = vld [vmem:[%s1100 + $0x10] sm:$0xf]
        %v1104 = vld [vmem:[%s1100 + $0x18] sm:$0xf]
        %v1105 = vld [vmem:[%s1100 + $0x20] sm:$0xf]
        %v1106 = vld [vmem:[%s1100 + $0x28] sm:$0xf]
        %v1107 = vld [vmem:[%s1100 + $0x30] sm:$0xf]
        %v1108 = vld [vmem:[%s1100 + $0x38] sm:$0xf]
        %v1109 = vld [vmem:[%s1100 + $0x4] sm:$0x1]
        %v1110 = vld [vmem:[%s1100 + $0xc] sm:$0x1]
        %v1111 = vld [vmem:[%s1100 + $0x14] sm:$0x1]
        %v1112 = vld [vmem:[%s1100 + $0x1c] sm:$0x1]
        %v1113 = vld [vmem:[%s1100 + $0x24] sm:$0x1]
        %v1114 = vld [vmem:[%s1100 + $0x2c] sm:$0x1]
        %v1115 = vld [vmem:[%s1100 + $0x34] sm:$0x1]
        %v1116 = vld [vmem:[%s1100 + $0x3c] sm:$0x1]
        %v1117 = vld [vmem:[%s1100] sm:$0xe]
        %v1118 = vld [vmem:[%s1100 + $0x8] sm:$0xe]
        %v1119 = vld [vmem:[%s1100 + $0x10] sm:$0xe]
        %v1120 = vld [vmem:[%s1100 + $0x18] sm:$0xe]
        %v1121 = vld [vmem:[%s1100 + $0x20] sm:$0xe]
        %v1122 = vld [vmem:[%s1100 + $0x28] sm:$0xe]
        %v1123 = vld [vmem:[%s1100 + $0x30] sm:$0xe]
        %v1124 = vld [vmem:[%s1100 + $0x38] sm:$0xe]
        %v1141 = vunpack.c.l.b16 %v1101
        %v1142 = vunpack.c.l.b16 %v1109
        %v1143 = vunpack.c.l.b16 %v1102
        %v1144 = vunpack.c.l.b16 %v1110
        %v1145 = vunpack.c.l.b16 %v1103
        %v1146 = vunpack.c.l.b16 %v1111
        %v1147 = vunpack.c.l.b16 %v1104
        %v1148 = vunpack.c.l.b16 %v1112
        %v1149 = vunpack.c.l.b16 %v1105
        %v1150 = vunpack.c.l.b16 %v1113
        %v1151 = vunpack.c.l.b16 %v1106
        %v1152 = vunpack.c.l.b16 %v1114
        %v1153 = vunpack.c.l.b16 %v1107
        %v1154 = vunpack.c.l.b16 %v1115
        %v1155 = vunpack.c.l.b16 %v1108
        %v1156 = vunpack.c.l.b16 %v1116
        %v1157 = vpack.c.b16 %v1142, %v1141
        %v1158 = vpack.c.b16 %v1144, %v1143
        %v1159 = vpack.c.b16 %v1146, %v1145
        %v1160 = vpack.c.b16 %v1148, %v1147
        %v1161 = vpack.c.b16 %v1150, %v1149
        %v1162 = vpack.c.b16 %v1152, %v1151
        %v1163 = vpack.c.b16 %v1154, %v1153
        %v1164 = vpack.c.b16 %v1156, %v1155
        %v1166 = vshrl.u32 %v1157, 16
        %v1168 = vshll.u32 %v1157, 16
        %v1170 = vrot.slane %v1168, 1
        %v1171 = vor.u32 %v1166, %v1170
        %v1173 = vshrl.u32 %v1158, 16
        %v1175 = vshll.u32 %v1158, 16
        %v1177 = vrot.slane %v1175, 1
        %v1178 = vor.u32 %v1173, %v1177
        %v1180 = vshrl.u32 %v1159, 16
        %v1182 = vshll.u32 %v1159, 16
        %v1184 = vrot.slane %v1182, 1
        %v1185 = vor.u32 %v1180, %v1184
        %v1187 = vshrl.u32 %v1160, 16
        %v1189 = vshll.u32 %v1160, 16
        %v1191 = vrot.slane %v1189, 1
        %v1192 = vor.u32 %v1187, %v1191
        %v1194 = vshrl.u32 %v1161, 16
        %v1196 = vshll.u32 %v1161, 16
        %v1198 = vrot.slane %v1196, 1
        %v1199 = vor.u32 %v1194, %v1198
        %v1201 = vshrl.u32 %v1162, 16
        %v1203 = vshll.u32 %v1162, 16
        %v1205 = vrot.slane %v1203, 1
        %v1206 = vor.u32 %v1201, %v1205
        %v1208 = vshrl.u32 %v1163, 16
        %v1210 = vshll.u32 %v1163, 16
        %v1212 = vrot.slane %v1210, 1
        %v1213 = vor.u32 %v1208, %v1212
        %v1215 = vshrl.u32 %v1164, 16
        %v1217 = vshll.u32 %v1164, 16
        %v1219 = vrot.slane %v1217, 1
        %v1220 = vor.u32 %v1215, %v1219
        %1221 = vrot.lane.b32.xlu0 %v1171, 4
        %v1222 = vpop.permute.xlu0 %1221
        %1223 = vrot.lane.b32.xlu0 %v1178, 4
        %v1224 = vpop.permute.xlu0 %1223
        %1225 = vrot.lane.b32.xlu0 %v1185, 4
        %v1226 = vpop.permute.xlu0 %1225
        %1227 = vrot.lane.b32.xlu0 %v1192, 4
        %v1228 = vpop.permute.xlu0 %1227
        %1229 = vrot.lane.b32.xlu0 %v1199, 4
        %v1230 = vpop.permute.xlu0 %1229
        %1231 = vrot.lane.b32.xlu0 %v1206, 4
        %v1232 = vpop.permute.xlu0 %1231
        %1233 = vrot.lane.b32.xlu0 %v1213, 4
        %v1234 = vpop.permute.xlu0 %1233
        %1235 = vrot.lane.b32.xlu0 %v1220, 4
        %v1236 = vpop.permute.xlu0 %1235
        %v1245 = vunpack.c.l.b16 %v1117
        %v1246 = vunpack.c.l.b16 %v1118
        %v1247 = vunpack.c.l.b16 %v1119
        %v1248 = vunpack.c.l.b16 %v1120
        %v1249 = vunpack.c.l.b16 %v1121
        %v1250 = vunpack.c.l.b16 %v1122
        %v1251 = vunpack.c.l.b16 %v1123
        %v1252 = vunpack.c.l.b16 %v1124
        %v1253 = vpack.c.b16 %v1142, %v1245
        %v1254 = vpack.c.b16 %v1144, %v1246
        %v1255 = vpack.c.b16 %v1146, %v1247
        %v1256 = vpack.c.b16 %v1148, %v1248
        %v1257 = vpack.c.b16 %v1150, %v1249
        %v1258 = vpack.c.b16 %v1152, %v1250
        %v1259 = vpack.c.b16 %v1154, %v1251
        %v1260 = vpack.c.b16 %v1156, %v1252
        %v1261 = vrot.slane %v1253, 1
        %v1262 = vrot.slane %v1254, 1
        %v1263 = vrot.slane %v1255, 1
        %v1264 = vrot.slane %v1256, 1
        %v1265 = vrot.slane %v1257, 1
        %v1266 = vrot.slane %v1258, 1
        %v1267 = vrot.slane %v1259, 1
        %v1268 = vrot.slane %v1260, 1
        %1269 = vrot.lane.b32.xlu0 %v1261, 8
        %v1270 = vpop.permute.xlu0 %1269
        %1271 = vrot.lane.b32.xlu0 %v1262, 8
        %v1272 = vpop.permute.xlu0 %1271
        %1273 = vrot.lane.b32.xlu0 %v1263, 8
        %v1274 = vpop.permute.xlu0 %1273
        %1275 = vrot.lane.b32.xlu0 %v1264, 8
        %v1276 = vpop.permute.xlu0 %1275
        %1277 = vrot.lane.b32.xlu0 %v1265, 8
        %v1278 = vpop.permute.xlu0 %1277
        %1279 = vrot.lane.b32.xlu0 %v1266, 8
        %v1280 = vpop.permute.xlu0 %1279
        %1281 = vrot.lane.b32.xlu0 %v1267, 8
        %v1282 = vpop.permute.xlu0 %1281
        %1283 = vrot.lane.b32.xlu0 %v1268, 8
        %v1284 = vpop.permute.xlu0 %1283
        %v1287 = vsel %vm689, %v1101, %v1222
        %v1290 = vsel %vm689, %v1102, %v1224
        %v1293 = vsel %vm689, %v1103, %v1226
        %v1296 = vsel %vm689, %v1104, %v1228
        %v1299 = vsel %vm689, %v1105, %v1230
        %v1302 = vsel %vm689, %v1106, %v1232
        %v1305 = vsel %vm689, %v1107, %v1234
        %v1308 = vsel %vm689, %v1108, %v1236
        %v1310 = vsel %vm714, %v1287, %v1270
        %v1312 = vsel %vm714, %v1290, %v1272
        %v1314 = vsel %vm714, %v1293, %v1274
        %v1316 = vsel %vm714, %v1296, %v1276
        %v1318 = vsel %vm714, %v1299, %v1278
        %v1320 = vsel %vm714, %v1302, %v1280
        %v1322 = vsel %vm714, %v1305, %v1282
        %v1324 = vsel %vm714, %v1308, %v1284
        %s1325 = scalar_lea.vmem %s1, 16
        %v1326 = vld [vmem:[%s1325] sm:$0xf]
        %v1327 = vld [vmem:[%s1325 + $0x4] sm:$0x3]
        %v1336 = vunpack.c.l.b16 %v1310
        %v1337 = vunpack.c.l.b16 %v1312
        %v1338 = vunpack.c.l.b16 %v1314
        %v1339 = vunpack.c.l.b16 %v1316
        %v1340 = vunpack.c.l.b16 %v1318
        %v1341 = vunpack.c.l.b16 %v1320
        %v1342 = vunpack.c.l.b16 %v1322
        %v1343 = vunpack.c.l.b16 %v1324
        %v1344 = vpack.c.b16 %v1337, %v1336
        %v1345 = vpack.c.b16 %v1339, %v1338
        %v1346 = vpack.c.b16 %v1341, %v1340
        %v1347 = vpack.c.b16 %v1343, %v1342
        %v1350 = vunpack.c.l.b16 %v1326
        %v1351 = vunpack.c.l.b16 %v1327
        %v1352 = vpack.c.b16 %v1351, %v1350
        %v1354 = vsel %vm985, %v1344, 0
        %v1357 = vsel %vm985, %v1345, 0
        %v1360 = vsel %vm985, %v1346, 0
        %v1363 = vsel %vm985, %v1347, 0
        %v1366 = vsel %vm998, %v1352, 0
        %1368 = vmatpush.bf16.msra.mxu0 0
        %1369 = vmatpush.bf16.msra.mxu0 0
        %1370 = vmatpush.bf16.msra.mxu0 0
        %1371 = vmatpush.bf16.msra.mxu0 0
        %1372 = vmatpush.bf16.msra.mxu0 0
        %1373 = vmatpush.bf16.msra.mxu0 0
        %1374 = vmatpush.bf16.msra.mxu0 0
        %1375 = vmatpush.bf16.msra.mxu0 %v1366
        %1376 = vmatmul.bf16.gmra.mxu0 %v1354
        %v1377 = vpop.f32.mrf.mxu0
        %v1378 = vadd.f32 0.0, %v1377
        %v1379 = vpop.f32.mrf.mxu0
        %v1380 = vadd.f32 0.0, %v1379
        %1381 = vmatmul.bf16.gmra.mxu0 %v1357
        %v1382 = vpop.f32.mrf.mxu0
        %v1383 = vadd.f32 0.0, %v1382
        %v1384 = vpop.f32.mrf.mxu0
        %v1385 = vadd.f32 0.0, %v1384
        %1386 = vmatmul.bf16.gmra.mxu0 %v1360
        %v1387 = vpop.f32.mrf.mxu0
        %v1388 = vadd.f32 0.0, %v1387
        %v1389 = vpop.f32.mrf.mxu0
        %v1390 = vadd.f32 0.0, %v1389
        %1391 = vmatmul.bf16.gmra.mxu0 %v1363
        %v1392 = vpop.f32.mrf.mxu0
        %v1393 = vadd.f32 0.0, %v1392
        %v1394 = vpop.f32.mrf.mxu0
        %v1395 = vadd.f32 0.0, %v1394
        %1396 = vdwg.mxu0
        %v1397 = vadd.f32 %v1081, %v1378
        %v1398 = vadd.f32 %v1083, %v1380
        %v1399 = vadd.f32 %v1086, %v1383
        %v1400 = vadd.f32 %v1088, %v1385
        %v1401 = vadd.f32 %v1091, %v1388
        %v1402 = vadd.f32 %v1093, %v1390
        %v1403 = vadd.f32 %v1096, %v1393
        %v1404 = vadd.f32 %v1098, %v1395
        %v1405 = vld [vmem:[%s2] sm:$0x1]
        %v1407 = vperm.slane %v1405, 0
        %v1409 = vadd.f32 %v1397, %v1407
        %v1410 = vadd.f32 %v1398, %v1407
        %v1411 = vadd.f32 %v1399, %v1407
        %v1412 = vadd.f32 %v1400, %v1407
        %v1413 = vadd.f32 %v1401, %v1407
        %v1414 = vadd.f32 %v1402, %v1407
        %v1415 = vadd.f32 %v1403, %v1407
        %v1416 = vadd.f32 %v1404, %v1407
        %v1417 = vmin.f32 %v1409, 0.0
        %v1418 = vmin.f32 %v1410, 0.0
        %v1419 = vmin.f32 %v1411, 0.0
        %v1420 = vmin.f32 %v1412, 0.0
        %v1421 = vmin.f32 %v1413, 0.0
        %v1422 = vmin.f32 %v1414, 0.0
        %v1423 = vmin.f32 %v1415, 0.0
        %v1424 = vmin.f32 %v1416, 0.0
        %v1425 = vmul.f32 %v1417, 1.442695
        %v1426 = vpow.pop %v1425
        %v1427 = vmul.f32 %v1418, 1.442695
        %v1428 = vpow.pop %v1427
        %v1429 = vmul.f32 %v1419, 1.442695
        %v1430 = vpow.pop %v1429
        %v1431 = vmul.f32 %v1420, 1.442695
        %v1432 = vpow.pop %v1431
        %v1433 = vmul.f32 %v1421, 1.442695
        %v1434 = vpow.pop %v1433
        %v1435 = vmul.f32 %v1422, 1.442695
        %v1436 = vpow.pop %v1435
        %v1437 = vmul.f32 %v1423, 1.442695
        %v1438 = vpow.pop %v1437
        %v1439 = vmul.f32 %v1424, 1.442695
        %v1440 = vpow.pop %v1439
        %v1441 = vsub.f32 %v1426, 1.0
        %v1442 = vsub.f32 %v1428, 1.0
        %v1443 = vsub.f32 %v1430, 1.0
        %v1444 = vsub.f32 %v1432, 1.0
        %v1445 = vsub.f32 %v1434, 1.0
        %v1446 = vsub.f32 %v1436, 1.0
        %v1447 = vsub.f32 %v1438, 1.0
        %v1448 = vsub.f32 %v1440, 1.0
        %v1449 = vmul.f32 %v1441, 1.6732632
        %v1450 = vmul.f32 %v1442, 1.6732632
        %v1451 = vmul.f32 %v1443, 1.6732632
        %v1452 = vmul.f32 %v1444, 1.6732632
        %v1453 = vmul.f32 %v1445, 1.6732632
        %v1454 = vmul.f32 %v1446, 1.6732632
        %v1455 = vmul.f32 %v1447, 1.6732632
        %v1456 = vmul.f32 %v1448, 1.6732632
        %vm1457 = vcmp.gt.f32.partialorder %v1409, 0.0
        %vm1458 = vcmp.gt.f32.partialorder %v1410, 0.0
        %vm1459 = vcmp.gt.f32.partialorder %v1411, 0.0
        %vm1460 = vcmp.gt.f32.partialorder %v1412, 0.0
        %vm1461 = vcmp.gt.f32.partialorder %v1413, 0.0
        %vm1462 = vcmp.gt.f32.partialorder %v1414, 0.0
        %vm1463 = vcmp.gt.f32.partialorder %v1415, 0.0
        %vm1464 = vcmp.gt.f32.partialorder %v1416, 0.0
        %v1465 = vsel %vm1457, %v1409, %v1449
        %v1466 = vsel %vm1458, %v1410, %v1450
        %v1467 = vsel %vm1459, %v1411, %v1451
        %v1468 = vsel %vm1460, %v1412, %v1452
        %v1469 = vsel %vm1461, %v1413, %v1453
        %v1470 = vsel %vm1462, %v1414, %v1454
        %v1471 = vsel %vm1463, %v1415, %v1455
        %v1472 = vsel %vm1464, %v1416, %v1456
        %v1473 = vmul.f32 %v1465, 1.050701
        %v1474 = vmul.f32 %v1466, 1.050701
        %v1475 = vmul.f32 %v1467, 1.050701
        %v1476 = vmul.f32 %v1468, 1.050701
        %v1477 = vmul.f32 %v1469, 1.050701
        %v1478 = vmul.f32 %v1470, 1.050701
        %v1479 = vmul.f32 %v1471, 1.050701
        %v1480 = vmul.f32 %v1472, 1.050701
        %v1481 = vpack.c.bf16 %v1473, %v1473
        %v1482 = vpack.c.bf16 %v1474, %v1474
        %v1483 = vpack.c.bf16 %v1475, %v1475
        %v1484 = vpack.c.bf16 %v1476, %v1476
        %v1485 = vpack.c.bf16 %v1477, %v1477
        %v1486 = vpack.c.bf16 %v1478, %v1478
        %v1487 = vpack.c.bf16 %v1479, %v1479
        %v1488 = vpack.c.bf16 %v1480, %v1480
        %v1490 = vshrl.u32 %v1481, 16
        %v1492 = vrot.slane %v1490, 7
        %v1493 = vshll.u32 %v1481, 16
        %v1495 = vor.u32 %v1492, %v1493
        %v1496 = vrot.slane %v1492, 4
        %v1498 = vshrl.u32 %v1482, 16
        %v1500 = vrot.slane %v1498, 7
        %v1501 = vshll.u32 %v1482, 16
        %v1503 = vor.u32 %v1500, %v1501
        %v1504 = vrot.slane %v1500, 4
        %v1506 = vshrl.u32 %v1483, 16
        %v1508 = vrot.slane %v1506, 7
        %v1509 = vshll.u32 %v1483, 16
        %v1511 = vor.u32 %v1508, %v1509
        %v1512 = vrot.slane %v1508, 4
        %v1514 = vshrl.u32 %v1484, 16
        %v1516 = vrot.slane %v1514, 7
        %v1517 = vshll.u32 %v1484, 16
        %v1519 = vor.u32 %v1516, %v1517
        %v1520 = vrot.slane %v1516, 4
        %v1522 = vshrl.u32 %v1485, 16
        %v1524 = vrot.slane %v1522, 7
        %v1525 = vshll.u32 %v1485, 16
        %v1527 = vor.u32 %v1524, %v1525
        %v1528 = vrot.slane %v1524, 4
        %v1530 = vshrl.u32 %v1486, 16
        %v1532 = vrot.slane %v1530, 7
        %v1533 = vshll.u32 %v1486, 16
        %v1535 = vor.u32 %v1532, %v1533
        %v1536 = vrot.slane %v1532, 4
        %v1538 = vshrl.u32 %v1487, 16
        %v1540 = vrot.slane %v1538, 7
        %v1541 = vshll.u32 %v1487, 16
        %v1543 = vor.u32 %v1540, %v1541
        %v1544 = vrot.slane %v1540, 4
        %v1546 = vshrl.u32 %v1488, 16
        %v1548 = vrot.slane %v1546, 7
        %v1549 = vshll.u32 %v1488, 16
        %v1551 = vor.u32 %v1548, %v1549
        %v1552 = vrot.slane %v1548, 4
        %s1569 = scalar_lea.vmem [#allocation3], 8
        %vm1570 = vcmask 60416
        %vm1571 = vmand %vm1570, %vm264
        %v1572 = vld [vmem:[%s1569] sm:$0xf]
        %v1573 = vsel %vm1571, %v1495, %v1572
        %1574 = vst [vmem:[%s1569] sm:$0xf] %v1573
        %v1575 = vld [vmem:[%s1569 + $0x4] sm:$0x1]
        %v1576 = vsel %vm304, %v1496, %v1575
        %1577 = vst [vmem:[%s1569 + $0x4] sm:$0x1] %v1576
        %v1578 = vld [vmem:[%s1569 + $0x8] sm:$0xf]
        %v1579 = vsel %vm1571, %v1503, %v1578
        %1580 = vst [vmem:[%s1569 + $0x8] sm:$0xf] %v1579
        %v1581 = vld [vmem:[%s1569 + $0xc] sm:$0x1]
        %v1582 = vsel %vm304, %v1504, %v1581
        %1583 = vst [vmem:[%s1569 + $0xc] sm:$0x1] %v1582
        %v1584 = vld [vmem:[%s1569 + $0x10] sm:$0xf]
        %v1585 = vsel %vm1571, %v1511, %v1584
        %1586 = vst [vmem:[%s1569 + $0x10] sm:$0xf] %v1585
        %v1587 = vld [vmem:[%s1569 + $0x14] sm:$0x1]
        %v1588 = vsel %vm304, %v1512, %v1587
        %1589 = vst [vmem:[%s1569 + $0x14] sm:$0x1] %v1588
        %v1590 = vld [vmem:[%s1569 + $0x18] sm:$0xf]
        %v1591 = vsel %vm1571, %v1519, %v1590
        %1592 = vst [vmem:[%s1569 + $0x18] sm:$0xf] %v1591
        %v1593 = vld [vmem:[%s1569 + $0x1c] sm:$0x1]
        %v1594 = vsel %vm304, %v1520, %v1593
        %1595 = vst [vmem:[%s1569 + $0x1c] sm:$0x1] %v1594
        %v1596 = vld [vmem:[%s1569 + $0x20] sm:$0xf]
        %v1597 = vsel %vm1571, %v1527, %v1596
        %1598 = vst [vmem:[%s1569 + $0x20] sm:$0xf] %v1597
        %v1599 = vld [vmem:[%s1569 + $0x24] sm:$0x1]
        %v1600 = vsel %vm304, %v1528, %v1599
        %1601 = vst [vmem:[%s1569 + $0x24] sm:$0x1] %v1600
        %v1602 = vld [vmem:[%s1569 + $0x28] sm:$0xf]
        %v1603 = vsel %vm1571, %v1535, %v1602
        %1604 = vst [vmem:[%s1569 + $0x28] sm:$0xf] %v1603
        %v1605 = vld [vmem:[%s1569 + $0x2c] sm:$0x1]
        %v1606 = vsel %vm304, %v1536, %v1605
        %1607 = vst [vmem:[%s1569 + $0x2c] sm:$0x1] %v1606
        %v1608 = vld [vmem:[%s1569 + $0x30] sm:$0xf]
        %v1609 = vsel %vm1571, %v1543, %v1608
        %1610 = vst [vmem:[%s1569 + $0x30] sm:$0xf] %v1609
        %v1611 = vld [vmem:[%s1569 + $0x34] sm:$0x1]
        %v1612 = vsel %vm304, %v1544, %v1611
        %1613 = vst [vmem:[%s1569 + $0x34] sm:$0x1] %v1612
        %v1614 = vld [vmem:[%s1569 + $0x38] sm:$0xf]
        %v1615 = vsel %vm1571, %v1551, %v1614
        %1616 = vst [vmem:[%s1569 + $0x38] sm:$0xf] %v1615
        %v1617 = vld [vmem:[%s1569 + $0x3c] sm:$0x1]
        %v1618 = vsel %vm304, %v1552, %v1617
        %1619 = vst [vmem:[%s1569 + $0x3c] sm:$0x1] %v1618
        %v1620 = vld [vmem:[#allocation3] sm:$0xf]
        %v1621 = vld [vmem:[#allocation3 + $0x8] sm:$0xf]
        %v1622 = vld [vmem:[#allocation3 + $0x10] sm:$0xf]
        %v1623 = vld [vmem:[#allocation3 + $0x18] sm:$0xf]
        %v1624 = vld [vmem:[#allocation3 + $0x20] sm:$0xf]
        %v1625 = vld [vmem:[#allocation3 + $0x28] sm:$0xf]
        %v1626 = vld [vmem:[#allocation3 + $0x30] sm:$0xf]
        %v1627 = vld [vmem:[#allocation3 + $0x38] sm:$0xf]
        %v1628 = vld [vmem:[#allocation3 + $0x4] sm:$0x1]
        %v1629 = vld [vmem:[#allocation3 + $0xc] sm:$0x1]
        %v1630 = vld [vmem:[#allocation3 + $0x14] sm:$0x1]
        %v1631 = vld [vmem:[#allocation3 + $0x1c] sm:$0x1]
        %v1632 = vld [vmem:[#allocation3 + $0x24] sm:$0x1]
        %v1633 = vld [vmem:[#allocation3 + $0x2c] sm:$0x1]
        %v1634 = vld [vmem:[#allocation3 + $0x34] sm:$0x1]
        %v1635 = vld [vmem:[#allocation3 + $0x3c] sm:$0x1]
        %v1636 = vld [vmem:[#allocation3] sm:$0xe]
        %v1637 = vld [vmem:[#allocation3 + $0x8] sm:$0xe]
        %v1638 = vld [vmem:[#allocation3 + $0x10] sm:$0xe]
        %v1639 = vld [vmem:[#allocation3 + $0x18] sm:$0xe]
        %v1640 = vld [vmem:[#allocation3 + $0x20] sm:$0xe]
        %v1641 = vld [vmem:[#allocation3 + $0x28] sm:$0xe]
        %v1642 = vld [vmem:[#allocation3 + $0x30] sm:$0xe]
        %v1643 = vld [vmem:[#allocation3 + $0x38] sm:$0xe]
        %v1660 = vunpack.c.l.b16 %v1620
        %v1661 = vunpack.c.l.b16 %v1628
        %v1662 = vunpack.c.l.b16 %v1621
        %v1663 = vunpack.c.l.b16 %v1629
        %v1664 = vunpack.c.l.b16 %v1622
        %v1665 = vunpack.c.l.b16 %v1630
        %v1666 = vunpack.c.l.b16 %v1623
        %v1667 = vunpack.c.l.b16 %v1631
        %v1668 = vunpack.c.l.b16 %v1624
        %v1669 = vunpack.c.l.b16 %v1632
        %v1670 = vunpack.c.l.b16 %v1625
        %v1671 = vunpack.c.l.b16 %v1633
        %v1672 = vunpack.c.l.b16 %v1626
        %v1673 = vunpack.c.l.b16 %v1634
        %v1674 = vunpack.c.l.b16 %v1627
        %v1675 = vunpack.c.l.b16 %v1635
        %v1676 = vpack.c.b16 %v1661, %v1660
        %v1677 = vpack.c.b16 %v1663, %v1662
        %v1678 = vpack.c.b16 %v1665, %v1664
        %v1679 = vpack.c.b16 %v1667, %v1666
        %v1680 = vpack.c.b16 %v1669, %v1668
        %v1681 = vpack.c.b16 %v1671, %v1670
        %v1682 = vpack.c.b16 %v1673, %v1672
        %v1683 = vpack.c.b16 %v1675, %v1674
        %v1685 = vshrl.u32 %v1676, 16
        %v1687 = vshll.u32 %v1676, 16
        %v1689 = vrot.slane %v1687, 1
        %v1690 = vor.u32 %v1685, %v1689
        %v1692 = vshrl.u32 %v1677, 16
        %v1694 = vshll.u32 %v1677, 16
        %v1696 = vrot.slane %v1694, 1
        %v1697 = vor.u32 %v1692, %v1696
        %v1699 = vshrl.u32 %v1678, 16
        %v1701 = vshll.u32 %v1678, 16
        %v1703 = vrot.slane %v1701, 1
        %v1704 = vor.u32 %v1699, %v1703
        %v1706 = vshrl.u32 %v1679, 16
        %v1708 = vshll.u32 %v1679, 16
        %v1710 = vrot.slane %v1708, 1
        %v1711 = vor.u32 %v1706, %v1710
        %v1713 = vshrl.u32 %v1680, 16
        %v1715 = vshll.u32 %v1680, 16
        %v1717 = vrot.slane %v1715, 1
        %v1718 = vor.u32 %v1713, %v1717
        %v1720 = vshrl.u32 %v1681, 16
        %v1722 = vshll.u32 %v1681, 16
        %v1724 = vrot.slane %v1722, 1
        %v1725 = vor.u32 %v1720, %v1724
        %v1727 = vshrl.u32 %v1682, 16
        %v1729 = vshll.u32 %v1682, 16
        %v1731 = vrot.slane %v1729, 1
        %v1732 = vor.u32 %v1727, %v1731
        %v1734 = vshrl.u32 %v1683, 16
        %v1736 = vshll.u32 %v1683, 16
        %v1738 = vrot.slane %v1736, 1
        %v1739 = vor.u32 %v1734, %v1738
        %1740 = vrot.lane.b32.xlu0 %v1690, 8
        %v1741 = vpop.permute.xlu0 %1740
        %1742 = vrot.lane.b32.xlu0 %v1697, 8
        %v1743 = vpop.permute.xlu0 %1742
        %1744 = vrot.lane.b32.xlu0 %v1704, 8
        %v1745 = vpop.permute.xlu0 %1744
        %1746 = vrot.lane.b32.xlu0 %v1711, 8
        %v1747 = vpop.permute.xlu0 %1746
        %1748 = vrot.lane.b32.xlu0 %v1718, 8
        %v1749 = vpop.permute.xlu0 %1748
        %1750 = vrot.lane.b32.xlu0 %v1725, 8
        %v1751 = vpop.permute.xlu0 %1750
        %1752 = vrot.lane.b32.xlu0 %v1732, 8
        %v1753 = vpop.permute.xlu0 %1752
        %1754 = vrot.lane.b32.xlu0 %v1739, 8
        %v1755 = vpop.permute.xlu0 %1754
        %v1764 = vunpack.c.l.b16 %v1636
        %v1765 = vunpack.c.l.b16 %v1637
        %v1766 = vunpack.c.l.b16 %v1638
        %v1767 = vunpack.c.l.b16 %v1639
        %v1768 = vunpack.c.l.b16 %v1640
        %v1769 = vunpack.c.l.b16 %v1641
        %v1770 = vunpack.c.l.b16 %v1642
        %v1771 = vunpack.c.l.b16 %v1643
        %v1772 = vpack.c.b16 %v1661, %v1764
        %v1773 = vpack.c.b16 %v1663, %v1765
        %v1774 = vpack.c.b16 %v1665, %v1766
        %v1775 = vpack.c.b16 %v1667, %v1767
        %v1776 = vpack.c.b16 %v1669, %v1768
        %v1777 = vpack.c.b16 %v1671, %v1769
        %v1778 = vpack.c.b16 %v1673, %v1770
        %v1779 = vpack.c.b16 %v1675, %v1771
        %v1780 = vrot.slane %v1772, 1
        %v1781 = vrot.slane %v1773, 1
        %v1782 = vrot.slane %v1774, 1
        %v1783 = vrot.slane %v1775, 1
        %v1784 = vrot.slane %v1776, 1
        %v1785 = vrot.slane %v1777, 1
        %v1786 = vrot.slane %v1778, 1
        %v1787 = vrot.slane %v1779, 1
        %1788 = vrot.lane.b32.xlu0 %v1780, 16
        %v1789 = vpop.permute.xlu0 %1788
        %1790 = vrot.lane.b32.xlu0 %v1781, 16
        %v1791 = vpop.permute.xlu0 %1790
        %1792 = vrot.lane.b32.xlu0 %v1782, 16
        %v1793 = vpop.permute.xlu0 %1792
        %1794 = vrot.lane.b32.xlu0 %v1783, 16
        %v1795 = vpop.permute.xlu0 %1794
        %1796 = vrot.lane.b32.xlu0 %v1784, 16
        %v1797 = vpop.permute.xlu0 %1796
        %1798 = vrot.lane.b32.xlu0 %v1785, 16
        %v1799 = vpop.permute.xlu0 %1798
        %1800 = vrot.lane.b32.xlu0 %v1786, 16
        %v1801 = vpop.permute.xlu0 %1800
        %1802 = vrot.lane.b32.xlu0 %v1787, 16
        %v1803 = vpop.permute.xlu0 %1802
        %v1806 = vsel %vm714, %v1620, %v1741
        %v1809 = vsel %vm714, %v1621, %v1743
        %v1812 = vsel %vm714, %v1622, %v1745
        %v1815 = vsel %vm714, %v1623, %v1747
        %v1818 = vsel %vm714, %v1624, %v1749
        %v1821 = vsel %vm714, %v1625, %v1751
        %v1824 = vsel %vm714, %v1626, %v1753
        %v1827 = vsel %vm714, %v1627, %v1755
        %vm1828 = vcmask 130048
        %v1830 = vsel %vm1828, %v1806, %v1789
        %v1832 = vsel %vm1828, %v1809, %v1791
        %v1834 = vsel %vm1828, %v1812, %v1793
        %v1836 = vsel %vm1828, %v1815, %v1795
        %v1838 = vsel %vm1828, %v1818, %v1797
        %v1840 = vsel %vm1828, %v1821, %v1799
        %v1842 = vsel %vm1828, %v1824, %v1801
        %v1844 = vsel %vm1828, %v1827, %v1803
        %v1845 = vld [vmem:[%s3] sm:$0xf]
        %v1846 = vld [vmem:[%s3 + $0x4] sm:$0xf]
        %v1847 = vld [vmem:[%s3 + $0x8] sm:$0xf]
        %v1848 = vld [vmem:[%s1569] sm:$0xf]
        %v1849 = vld [vmem:[%s1569 + $0x8] sm:$0xf]
        %v1850 = vld [vmem:[%s1569 + $0x10] sm:$0xf]
        %v1851 = vld [vmem:[%s1569 + $0x18] sm:$0xf]
        %v1852 = vld [vmem:[%s1569 + $0x20] sm:$0xf]
        %v1853 = vld [vmem:[%s1569 + $0x28] sm:$0xf]
        %v1854 = vld [vmem:[%s1569 + $0x30] sm:$0xf]
        %v1855 = vld [vmem:[%s1569 + $0x38] sm:$0xf]
        %v1856 = vld [vmem:[%s1569 + $0x4] sm:$0x1]
        %v1857 = vld [vmem:[%s1569 + $0xc] sm:$0x1]
        %v1858 = vld [vmem:[%s1569 + $0x14] sm:$0x1]
        %v1859 = vld [vmem:[%s1569 + $0x1c] sm:$0x1]
        %v1860 = vld [vmem:[%s1569 + $0x24] sm:$0x1]
        %v1861 = vld [vmem:[%s1569 + $0x2c] sm:$0x1]
        %v1862 = vld [vmem:[%s1569 + $0x34] sm:$0x1]
        %v1863 = vld [vmem:[%s1569 + $0x3c] sm:$0x1]
        %v1864 = vld [vmem:[%s1569] sm:$0xe]
        %v1865 = vld [vmem:[%s1569 + $0x8] sm:$0xe]
        %v1866 = vld [vmem:[%s1569 + $0x10] sm:$0xe]
        %v1867 = vld [vmem:[%s1569 + $0x18] sm:$0xe]
        %v1868 = vld [vmem:[%s1569 + $0x20] sm:$0xe]
        %v1869 = vld [vmem:[%s1569 + $0x28] sm:$0xe]
        %v1870 = vld [vmem:[%s1569 + $0x30] sm:$0xe]
        %v1871 = vld [vmem:[%s1569 + $0x38] sm:$0xe]
        %v1888 = vunpack.c.l.b16 %v1848
        %v1889 = vunpack.c.l.b16 %v1856
        %v1890 = vunpack.c.l.b16 %v1849
        %v1891 = vunpack.c.l.b16 %v1857
        %v1892 = vunpack.c.l.b16 %v1850
        %v1893 = vunpack.c.l.b16 %v1858
        %v1894 = vunpack.c.l.b16 %v1851
        %v1895 = vunpack.c.l.b16 %v1859
        %v1896 = vunpack.c.l.b16 %v1852
        %v1897 = vunpack.c.l.b16 %v1860
        %v1898 = vunpack.c.l.b16 %v1853
        %v1899 = vunpack.c.l.b16 %v1861
        %v1900 = vunpack.c.l.b16 %v1854
        %v1901 = vunpack.c.l.b16 %v1862
        %v1902 = vunpack.c.l.b16 %v1855
        %v1903 = vunpack.c.l.b16 %v1863
        %v1904 = vpack.c.b16 %v1889, %v1888
        %v1905 = vpack.c.b16 %v1891, %v1890
        %v1906 = vpack.c.b16 %v1893, %v1892
        %v1907 = vpack.c.b16 %v1895, %v1894
        %v1908 = vpack.c.b16 %v1897, %v1896
        %v1909 = vpack.c.b16 %v1899, %v1898
        %v1910 = vpack.c.b16 %v1901, %v1900
        %v1911 = vpack.c.b16 %v1903, %v1902
        %v1913 = vshrl.u32 %v1904, 16
        %v1915 = vshll.u32 %v1904, 16
        %v1917 = vrot.slane %v1915, 1
        %v1918 = vor.u32 %v1913, %v1917
        %v1920 = vshrl.u32 %v1905, 16
        %v1922 = vshll.u32 %v1905, 16
        %v1924 = vrot.slane %v1922, 1
        %v1925 = vor.u32 %v1920, %v1924
        %v1927 = vshrl.u32 %v1906, 16
        %v1929 = vshll.u32 %v1906, 16
        %v1931 = vrot.slane %v1929, 1
        %v1932 = vor.u32 %v1927, %v1931
        %v1934 = vshrl.u32 %v1907, 16
        %v1936 = vshll.u32 %v1907, 16
        %v1938 = vrot.slane %v1936, 1
        %v1939 = vor.u32 %v1934, %v1938
        %v1941 = vshrl.u32 %v1908, 16
        %v1943 = vshll.u32 %v1908, 16
        %v1945 = vrot.slane %v1943, 1
        %v1946 = vor.u32 %v1941, %v1945
        %v1948 = vshrl.u32 %v1909, 16
        %v1950 = vshll.u32 %v1909, 16
        %v1952 = vrot.slane %v1950, 1
        %v1953 = vor.u32 %v1948, %v1952
        %v1955 = vshrl.u32 %v1910, 16
        %v1957 = vshll.u32 %v1910, 16
        %v1959 = vrot.slane %v1957, 1
        %v1960 = vor.u32 %v1955, %v1959
        %v1962 = vshrl.u32 %v1911, 16
        %v1964 = vshll.u32 %v1911, 16
        %v1966 = vrot.slane %v1964, 1
        %v1967 = vor.u32 %v1962, %v1966
        %1968 = vrot.lane.b32.xlu0 %v1918, 8
        %v1969 = vpop.permute.xlu0 %1968
        %1970 = vrot.lane.b32.xlu0 %v1925, 8
        %v1971 = vpop.permute.xlu0 %1970
        %1972 = vrot.lane.b32.xlu0 %v1932, 8
        %v1973 = vpop.permute.xlu0 %1972
        %1974 = vrot.lane.b32.xlu0 %v1939, 8
        %v1975 = vpop.permute.xlu0 %1974
        %1976 = vrot.lane.b32.xlu0 %v1946, 8
        %v1977 = vpop.permute.xlu0 %1976
        %1978 = vrot.lane.b32.xlu0 %v1953, 8
        %v1979 = vpop.permute.xlu0 %1978
        %1980 = vrot.lane.b32.xlu0 %v1960, 8
        %v1981 = vpop.permute.xlu0 %1980
        %1982 = vrot.lane.b32.xlu0 %v1967, 8
        %v1983 = vpop.permute.xlu0 %1982
        %v1992 = vunpack.c.l.b16 %v1864
        %v1993 = vunpack.c.l.b16 %v1865
        %v1994 = vunpack.c.l.b16 %v1866
        %v1995 = vunpack.c.l.b16 %v1867
        %v1996 = vunpack.c.l.b16 %v1868
        %v1997 = vunpack.c.l.b16 %v1869
        %v1998 = vunpack.c.l.b16 %v1870
        %v1999 = vunpack.c.l.b16 %v1871
        %v2000 = vpack.c.b16 %v1889, %v1992
        %v2001 = vpack.c.b16 %v1891, %v1993
        %v2002 = vpack.c.b16 %v1893, %v1994
        %v2003 = vpack.c.b16 %v1895, %v1995
        %v2004 = vpack.c.b16 %v1897, %v1996
        %v2005 = vpack.c.b16 %v1899, %v1997
        %v2006 = vpack.c.b16 %v1901, %v1998
        %v2007 = vpack.c.b16 %v1903, %v1999
        %v2008 = vrot.slane %v2000, 1
        %v2009 = vrot.slane %v2001, 1
        %v2010 = vrot.slane %v2002, 1
        %v2011 = vrot.slane %v2003, 1
        %v2012 = vrot.slane %v2004, 1
        %v2013 = vrot.slane %v2005, 1
        %v2014 = vrot.slane %v2006, 1
        %v2015 = vrot.slane %v2007, 1
        %2016 = vrot.lane.b32.xlu0 %v2008, 16
        %v2017 = vpop.permute.xlu0 %2016
        %2018 = vrot.lane.b32.xlu0 %v2009, 16
        %v2019 = vpop.permute.xlu0 %2018
        %2020 = vrot.lane.b32.xlu0 %v2010, 16
        %v2021 = vpop.permute.xlu0 %2020
        %2022 = vrot.lane.b32.xlu0 %v2011, 16
        %v2023 = vpop.permute.xlu0 %2022
        %2024 = vrot.lane.b32.xlu0 %v2012, 16
        %v2025 = vpop.permute.xlu0 %2024
        %2026 = vrot.lane.b32.xlu0 %v2013, 16
        %v2027 = vpop.permute.xlu0 %2026
        %2028 = vrot.lane.b32.xlu0 %v2014, 16
        %v2029 = vpop.permute.xlu0 %2028
        %2030 = vrot.lane.b32.xlu0 %v2015, 16
        %v2031 = vpop.permute.xlu0 %2030
        %v2034 = vsel %vm714, %v1848, %v1969
        %v2037 = vsel %vm714, %v1849, %v1971
        %v2040 = vsel %vm714, %v1850, %v1973
        %v2043 = vsel %vm714, %v1851, %v1975
        %v2046 = vsel %vm714, %v1852, %v1977
        %v2049 = vsel %vm714, %v1853, %v1979
        %v2052 = vsel %vm714, %v1854, %v1981
        %v2055 = vsel %vm714, %v1855, %v1983
        %v2057 = vsel %vm1828, %v2034, %v2017
        %v2059 = vsel %vm1828, %v2037, %v2019
        %v2061 = vsel %vm1828, %v2040, %v2021
        %v2063 = vsel %vm1828, %v2043, %v2023
        %v2065 = vsel %vm1828, %v2046, %v2025
        %v2067 = vsel %vm1828, %v2049, %v2027
        %v2069 = vsel %vm1828, %v2052, %v2029
        %v2071 = vsel %vm1828, %v2055, %v2031
        %s2072 = scalar_lea.vmem %s3, 12
        %v2073 = vld [vmem:[%s2072] sm:$0xf]
        %v2074 = vld [vmem:[%s2072 + $0x4] sm:$0xf]
        %v2075 = vld [vmem:[%s2072 + $0x8] sm:$0xf]
        %v2084 = vunpack.c.l.b16 %v2057
        %v2085 = vunpack.c.l.b16 %v2059
        %v2086 = vunpack.c.l.b16 %v2061
        %v2087 = vunpack.c.l.b16 %v2063
        %v2088 = vunpack.c.l.b16 %v2065
        %v2089 = vunpack.c.l.b16 %v2067
        %v2090 = vunpack.c.l.b16 %v2069
        %v2091 = vunpack.c.l.b16 %v2071
        %v2092 = vpack.c.b16 %v2085, %v2084
        %v2093 = vpack.c.b16 %v2087, %v2086
        %v2094 = vpack.c.b16 %v2089, %v2088
        %v2095 = vpack.c.b16 %v2091, %v2090
        %v2099 = vunpack.c.l.b16 %v2073
        %v2100 = vunpack.c.l.b16 %v2074
        %v2101 = vunpack.c.l.b16 %v2075
        %v2102 = vpack.c.b16 %v2100, %v2099
        %v2103 = vpack.c.b16 %v2101, %v2101
        %vm2105 = vcmask 195584
        %v2107 = vsel %vm2105, %v2092, 0
        %v2110 = vsel %vm2105, %v2093, 0
        %v2113 = vsel %vm2105, %v2094, 0
        %v2116 = vsel %vm2105, %v2095, 0
        %vm2118 = vcmask 1043456
        %v2120 = vsel %vm2118, %v2103, 0
        %2122 = vmatpush.bf16.msra.mxu0 0
        %2123 = vmatpush.bf16.msra.mxu0 0
        %2124 = vmatpush.bf16.msra.mxu0 0
        %2125 = vmatpush.bf16.msra.mxu0 0
        %2126 = vmatpush.bf16.msra.mxu0 0
        %2127 = vmatpush.bf16.msra.mxu0 0
        %2128 = vmatpush.bf16.msra.mxu0 %v2120
        %2129 = vmatpush.bf16.msra.mxu0 %v2102
        %2130 = vmatmul.bf16.gmra.mxu0 %v2107
        %v2131 = vpop.f32.mrf.mxu0
        %v2132 = vadd.f32 0.0, %v2131
        %v2133 = vpop.f32.mrf.mxu0
        %v2134 = vadd.f32 0.0, %v2133
        %2135 = vmatmul.bf16.gmra.mxu0 %v2110
        %v2136 = vpop.f32.mrf.mxu0
        %v2137 = vadd.f32 0.0, %v2136
        %v2138 = vpop.f32.mrf.mxu0
        %v2139 = vadd.f32 0.0, %v2138
        %2140 = vmatmul.bf16.gmra.mxu0 %v2113
        %v2141 = vpop.f32.mrf.mxu0
        %v2142 = vadd.f32 0.0, %v2141
        %v2143 = vpop.f32.mrf.mxu0
        %v2144 = vadd.f32 0.0, %v2143
        %2145 = vmatmul.bf16.gmra.mxu0 %v2116
        %v2146 = vpop.f32.mrf.mxu0
        %v2147 = vadd.f32 0.0, %v2146
        %v2148 = vpop.f32.mrf.mxu0
        %v2149 = vadd.f32 0.0, %v2148
        %2150 = vdwg.mxu0
        %v2159 = vunpack.c.l.b16 %v1830
        %v2160 = vunpack.c.l.b16 %v1832
        %v2161 = vunpack.c.l.b16 %v1834
        %v2162 = vunpack.c.l.b16 %v1836
        %v2163 = vunpack.c.l.b16 %v1838
        %v2164 = vunpack.c.l.b16 %v1840
        %v2165 = vunpack.c.l.b16 %v1842
        %v2166 = vunpack.c.l.b16 %v1844
        %v2167 = vpack.c.b16 %v2160, %v2159
        %v2168 = vpack.c.b16 %v2162, %v2161
        %v2169 = vpack.c.b16 %v2164, %v2163
        %v2170 = vpack.c.b16 %v2166, %v2165
        %v2174 = vunpack.c.l.b16 %v1845
        %v2175 = vunpack.c.l.b16 %v1846
        %v2176 = vunpack.c.l.b16 %v1847
        %v2177 = vpack.c.b16 %v2175, %v2174
        %v2178 = vpack.c.b16 %v2176, %v2176
        %v2181 = vsel %vm2105, %v2167, 0
        %v2184 = vsel %vm2105, %v2168, 0
        %v2187 = vsel %vm2105, %v2169, 0
        %v2190 = vsel %vm2105, %v2170, 0
        %v2193 = vsel %vm2118, %v2178, 0
        %2195 = vmatpush.bf16.msra.mxu0 0
        %2196 = vmatpush.bf16.msra.mxu0 0
        %2197 = vmatpush.bf16.msra.mxu0 0
        %2198 = vmatpush.bf16.msra.mxu0 0
        %2199 = vmatpush.bf16.msra.mxu0 0
        %2200 = vmatpush.bf16.msra.mxu0 0
        %2201 = vmatpush.bf16.msra.mxu0 %v2193
        %2202 = vmatpush.bf16.msra.mxu0 %v2177
        %2203 = vmatmul.bf16.gmra.mxu0 %v2181
        %v2204 = vpop.f32.mrf.mxu0
        %v2205 = vadd.f32 %v2132, %v2204
        %v2206 = vpop.f32.mrf.mxu0
        %v2207 = vadd.f32 %v2134, %v2206
        %2208 = vmatmul.bf16.gmra.mxu0 %v2184
        %v2209 = vpop.f32.mrf.mxu0
        %v2210 = vadd.f32 %v2137, %v2209
        %v2211 = vpop.f32.mrf.mxu0
        %v2212 = vadd.f32 %v2139, %v2211
        %2213 = vmatmul.bf16.gmra.mxu0 %v2187
        %v2214 = vpop.f32.mrf.mxu0
        %v2215 = vadd.f32 %v2142, %v2214
        %v2216 = vpop.f32.mrf.mxu0
        %v2217 = vadd.f32 %v2144, %v2216
        %2218 = vmatmul.bf16.gmra.mxu0 %v2190
        %v2219 = vpop.f32.mrf.mxu0
        %v2220 = vadd.f32 %v2147, %v2219
        %v2221 = vpop.f32.mrf.mxu0
        %v2222 = vadd.f32 %v2149, %v2221
        %2223 = vdwg.mxu0
        %s2224 = scalar_lea.vmem [#allocation3], 16
        %v2225 = vld [vmem:[%s2224] sm:$0xf]
        %v2226 = vld [vmem:[%s2224 + $0x8] sm:$0xf]
        %v2227 = vld [vmem:[%s2224 + $0x10] sm:$0xf]
        %v2228 = vld [vmem:[%s2224 + $0x18] sm:$0xf]
        %v2229 = vld [vmem:[%s2224 + $0x20] sm:$0xf]
        %v2230 = vld [vmem:[%s2224 + $0x28] sm:$0xf]
        %v2231 = vld [vmem:[%s2224 + $0x30] sm:$0xf]
        %v2232 = vld [vmem:[%s2224 + $0x38] sm:$0xf]
        %v2233 = vld [vmem:[%s2224 + $0x4] sm:$0x1]
        %v2234 = vld [vmem:[%s2224 + $0xc] sm:$0x1]
        %v2235 = vld [vmem:[%s2224 + $0x14] sm:$0x1]
        %v2236 = vld [vmem:[%s2224 + $0x1c] sm:$0x1]
        %v2237 = vld [vmem:[%s2224 + $0x24] sm:$0x1]
        %v2238 = vld [vmem:[%s2224 + $0x2c] sm:$0x1]
        %v2239 = vld [vmem:[%s2224 + $0x34] sm:$0x1]
        %v2240 = vld [vmem:[%s2224 + $0x3c] sm:$0x1]
        %v2241 = vld [vmem:[%s2224] sm:$0xe]
        %v2242 = vld [vmem:[%s2224 + $0x8] sm:$0xe]
        %v2243 = vld [vmem:[%s2224 + $0x10] sm:$0xe]
        %v2244 = vld [vmem:[%s2224 + $0x18] sm:$0xe]
        %v2245 = vld [vmem:[%s2224 + $0x20] sm:$0xe]
        %v2246 = vld [vmem:[%s2224 + $0x28] sm:$0xe]
        %v2247 = vld [vmem:[%s2224 + $0x30] sm:$0xe]
        %v2248 = vld [vmem:[%s2224 + $0x38] sm:$0xe]
        %v2265 = vunpack.c.l.b16 %v2225
        %v2266 = vunpack.c.l.b16 %v2233
        %v2267 = vunpack.c.l.b16 %v2226
        %v2268 = vunpack.c.l.b16 %v2234
        %v2269 = vunpack.c.l.b16 %v2227
        %v2270 = vunpack.c.l.b16 %v2235
        %v2271 = vunpack.c.l.b16 %v2228
        %v2272 = vunpack.c.l.b16 %v2236
        %v2273 = vunpack.c.l.b16 %v2229
        %v2274 = vunpack.c.l.b16 %v2237
        %v2275 = vunpack.c.l.b16 %v2230
        %v2276 = vunpack.c.l.b16 %v2238
        %v2277 = vunpack.c.l.b16 %v2231
        %v2278 = vunpack.c.l.b16 %v2239
        %v2279 = vunpack.c.l.b16 %v2232
        %v2280 = vunpack.c.l.b16 %v2240
        %v2281 = vpack.c.b16 %v2266, %v2265
        %v2282 = vpack.c.b16 %v2268, %v2267
        %v2283 = vpack.c.b16 %v2270, %v2269
        %v2284 = vpack.c.b16 %v2272, %v2271
        %v2285 = vpack.c.b16 %v2274, %v2273
        %v2286 = vpack.c.b16 %v2276, %v2275
        %v2287 = vpack.c.b16 %v2278, %v2277
        %v2288 = vpack.c.b16 %v2280, %v2279
        %v2290 = vshrl.u32 %v2281, 16
        %v2292 = vshll.u32 %v2281, 16
        %v2294 = vrot.slane %v2292, 1
        %v2295 = vor.u32 %v2290, %v2294
        %v2297 = vshrl.u32 %v2282, 16
        %v2299 = vshll.u32 %v2282, 16
        %v2301 = vrot.slane %v2299, 1
        %v2302 = vor.u32 %v2297, %v2301
        %v2304 = vshrl.u32 %v2283, 16
        %v2306 = vshll.u32 %v2283, 16
        %v2308 = vrot.slane %v2306, 1
        %v2309 = vor.u32 %v2304, %v2308
        %v2311 = vshrl.u32 %v2284, 16
        %v2313 = vshll.u32 %v2284, 16
        %v2315 = vrot.slane %v2313, 1
        %v2316 = vor.u32 %v2311, %v2315
        %v2318 = vshrl.u32 %v2285, 16
        %v2320 = vshll.u32 %v2285, 16
        %v2322 = vrot.slane %v2320, 1
        %v2323 = vor.u32 %v2318, %v2322
        %v2325 = vshrl.u32 %v2286, 16
        %v2327 = vshll.u32 %v2286, 16
        %v2329 = vrot.slane %v2327, 1
        %v2330 = vor.u32 %v2325, %v2329
        %v2332 = vshrl.u32 %v2287, 16
        %v2334 = vshll.u32 %v2287, 16
        %v2336 = vrot.slane %v2334, 1
        %v2337 = vor.u32 %v2332, %v2336
        %v2339 = vshrl.u32 %v2288, 16
        %v2341 = vshll.u32 %v2288, 16
        %v2343 = vrot.slane %v2341, 1
        %v2344 = vor.u32 %v2339, %v2343
        %2345 = vrot.lane.b32.xlu0 %v2295, 8
        %v2346 = vpop.permute.xlu0 %2345
        %2347 = vrot.lane.b32.xlu0 %v2302, 8
        %v2348 = vpop.permute.xlu0 %2347
        %2349 = vrot.lane.b32.xlu0 %v2309, 8
        %v2350 = vpop.permute.xlu0 %2349
        %2351 = vrot.lane.b32.xlu0 %v2316, 8
        %v2352 = vpop.permute.xlu0 %2351
        %2353 = vrot.lane.b32.xlu0 %v2323, 8
        %v2354 = vpop.permute.xlu0 %2353
        %2355 = vrot.lane.b32.xlu0 %v2330, 8
        %v2356 = vpop.permute.xlu0 %2355
        %2357 = vrot.lane.b32.xlu0 %v2337, 8
        %v2358 = vpop.permute.xlu0 %2357
        %2359 = vrot.lane.b32.xlu0 %v2344, 8
        %v2360 = vpop.permute.xlu0 %2359
        %v2369 = vunpack.c.l.b16 %v2241
        %v2370 = vunpack.c.l.b16 %v2242
        %v2371 = vunpack.c.l.b16 %v2243
        %v2372 = vunpack.c.l.b16 %v2244
        %v2373 = vunpack.c.l.b16 %v2245
        %v2374 = vunpack.c.l.b16 %v2246
        %v2375 = vunpack.c.l.b16 %v2247
        %v2376 = vunpack.c.l.b16 %v2248
        %v2377 = vpack.c.b16 %v2266, %v2369
        %v2378 = vpack.c.b16 %v2268, %v2370
        %v2379 = vpack.c.b16 %v2270, %v2371
        %v2380 = vpack.c.b16 %v2272, %v2372
        %v2381 = vpack.c.b16 %v2274, %v2373
        %v2382 = vpack.c.b16 %v2276, %v2374
        %v2383 = vpack.c.b16 %v2278, %v2375
        %v2384 = vpack.c.b16 %v2280, %v2376
        %v2385 = vrot.slane %v2377, 1
        %v2386 = vrot.slane %v2378, 1
        %v2387 = vrot.slane %v2379, 1
        %v2388 = vrot.slane %v2380, 1
        %v2389 = vrot.slane %v2381, 1
        %v2390 = vrot.slane %v2382, 1
        %v2391 = vrot.slane %v2383, 1
        %v2392 = vrot.slane %v2384, 1
        %2393 = vrot.lane.b32.xlu0 %v2385, 16
        %v2394 = vpop.permute.xlu0 %2393
        %2395 = vrot.lane.b32.xlu0 %v2386, 16
        %v2396 = vpop.permute.xlu0 %2395
        %2397 = vrot.lane.b32.xlu0 %v2387, 16
        %v2398 = vpop.permute.xlu0 %2397
        %2399 = vrot.lane.b32.xlu0 %v2388, 16
        %v2400 = vpop.permute.xlu0 %2399
        %2401 = vrot.lane.b32.xlu0 %v2389, 16
        %v2402 = vpop.permute.xlu0 %2401
        %2403 = vrot.lane.b32.xlu0 %v2390, 16
        %v2404 = vpop.permute.xlu0 %2403
        %2405 = vrot.lane.b32.xlu0 %v2391, 16
        %v2406 = vpop.permute.xlu0 %2405
        %2407 = vrot.lane.b32.xlu0 %v2392, 16
        %v2408 = vpop.permute.xlu0 %2407
        %v2411 = vsel %vm714, %v2225, %v2346
        %v2414 = vsel %vm714, %v2226, %v2348
        %v2417 = vsel %vm714, %v2227, %v2350
        %v2420 = vsel %vm714, %v2228, %v2352
        %v2423 = vsel %vm714, %v2229, %v2354
        %v2426 = vsel %vm714, %v2230, %v2356
        %v2429 = vsel %vm714, %v2231, %v2358
        %v2432 = vsel %vm714, %v2232, %v2360
        %v2434 = vsel %vm1828, %v2411, %v2394
        %v2436 = vsel %vm1828, %v2414, %v2396
        %v2438 = vsel %vm1828, %v2417, %v2398
        %v2440 = vsel %vm1828, %v2420, %v2400
        %v2442 = vsel %vm1828, %v2423, %v2402
        %v2444 = vsel %vm1828, %v2426, %v2404
        %v2446 = vsel %vm1828, %v2429, %v2406
        %v2448 = vsel %vm1828, %v2432, %v2408
        %s2449 = scalar_lea.vmem %s3, 24
        %v2450 = vld [vmem:[%s2449] sm:$0xf]
        %v2451 = vld [vmem:[%s2449 + $0x4] sm:$0xf]
        %v2452 = vld [vmem:[%s2449 + $0x8] sm:$0xf]
        %v2461 = vunpack.c.l.b16 %v2434
        %v2462 = vunpack.c.l.b16 %v2436
        %v2463 = vunpack.c.l.b16 %v2438
        %v2464 = vunpack.c.l.b16 %v2440
        %v2465 = vunpack.c.l.b16 %v2442
        %v2466 = vunpack.c.l.b16 %v2444
        %v2467 = vunpack.c.l.b16 %v2446
        %v2468 = vunpack.c.l.b16 %v2448
        %v2469 = vpack.c.b16 %v2462, %v2461
        %v2470 = vpack.c.b16 %v2464, %v2463
        %v2471 = vpack.c.b16 %v2466, %v2465
        %v2472 = vpack.c.b16 %v2468, %v2467
        %v2476 = vunpack.c.l.b16 %v2450
        %v2477 = vunpack.c.l.b16 %v2451
        %v2478 = vunpack.c.l.b16 %v2452
        %v2479 = vpack.c.b16 %v2477, %v2476
        %v2480 = vpack.c.b16 %v2478, %v2478
        %v2483 = vsel %vm2105, %v2469, 0
        %v2486 = vsel %vm2105, %v2470, 0
        %v2489 = vsel %vm2105, %v2471, 0
        %v2492 = vsel %vm2105, %v2472, 0
        %v2495 = vsel %vm2118, %v2480, 0
        %2497 = vmatpush.bf16.msra.mxu0 0
        %2498 = vmatpush.bf16.msra.mxu0 0
        %2499 = vmatpush.bf16.msra.mxu0 0
        %2500 = vmatpush.bf16.msra.mxu0 0
        %2501 = vmatpush.bf16.msra.mxu0 0
        %2502 = vmatpush.bf16.msra.mxu0 0
        %2503 = vmatpush.bf16.msra.mxu0 %v2495
        %2504 = vmatpush.bf16.msra.mxu0 %v2479
        %2505 = vmatmul.bf16.gmra.mxu0 %v2483
        %v2506 = vpop.f32.mrf.mxu0
        %v2507 = vadd.f32 0.0, %v2506
        %v2508 = vpop.f32.mrf.mxu0
        %v2509 = vadd.f32 0.0, %v2508
        %2510 = vmatmul.bf16.gmra.mxu0 %v2486
        %v2511 = vpop.f32.mrf.mxu0
        %v2512 = vadd.f32 0.0, %v2511
        %v2513 = vpop.f32.mrf.mxu0
        %v2514 = vadd.f32 0.0, %v2513
        %2515 = vmatmul.bf16.gmra.mxu0 %v2489
        %v2516 = vpop.f32.mrf.mxu0
        %v2517 = vadd.f32 0.0, %v2516
        %v2518 = vpop.f32.mrf.mxu0
        %v2519 = vadd.f32 0.0, %v2518
        %2520 = vmatmul.bf16.gmra.mxu0 %v2492
        %v2521 = vpop.f32.mrf.mxu0
        %v2522 = vadd.f32 0.0, %v2521
        %v2523 = vpop.f32.mrf.mxu0
        %v2524 = vadd.f32 0.0, %v2523
        %2525 = vdwg.mxu0
        %v2526 = vadd.f32 %v2205, %v2507
        %v2527 = vadd.f32 %v2207, %v2509
        %v2528 = vadd.f32 %v2210, %v2512
        %v2529 = vadd.f32 %v2212, %v2514
        %v2530 = vadd.f32 %v2215, %v2517
        %v2531 = vadd.f32 %v2217, %v2519
        %v2532 = vadd.f32 %v2220, %v2522
        %v2533 = vadd.f32 %v2222, %v2524
        %v2534 = vld [vmem:[%s4] sm:$0x1]
        %v2536 = vperm.slane %v2534, 0
        %v2538 = vadd.f32 %v2526, %v2536
        %v2539 = vadd.f32 %v2527, %v2536
        %v2540 = vadd.f32 %v2528, %v2536
        %v2541 = vadd.f32 %v2529, %v2536
        %v2542 = vadd.f32 %v2530, %v2536
        %v2543 = vadd.f32 %v2531, %v2536
        %v2544 = vadd.f32 %v2532, %v2536
        %v2545 = vadd.f32 %v2533, %v2536
        %v2546 = vmin.f32 %v2538, 0.0
        %v2547 = vmin.f32 %v2539, 0.0
        %v2548 = vmin.f32 %v2540, 0.0
        %v2549 = vmin.f32 %v2541, 0.0
        %v2550 = vmin.f32 %v2542, 0.0
        %v2551 = vmin.f32 %v2543, 0.0
        %v2552 = vmin.f32 %v2544, 0.0
        %v2553 = vmin.f32 %v2545, 0.0
        %v2554 = vmul.f32 %v2546, 1.442695
        %v2555 = vpow.pop %v2554
        %v2556 = vmul.f32 %v2547, 1.442695
        %v2557 = vpow.pop %v2556
        %v2558 = vmul.f32 %v2548, 1.442695
        %v2559 = vpow.pop %v2558
        %v2560 = vmul.f32 %v2549, 1.442695
        %v2561 = vpow.pop %v2560
        %v2562 = vmul.f32 %v2550, 1.442695
        %v2563 = vpow.pop %v2562
        %v2564 = vmul.f32 %v2551, 1.442695
        %v2565 = vpow.pop %v2564
        %v2566 = vmul.f32 %v2552, 1.442695
        %v2567 = vpow.pop %v2566
        %v2568 = vmul.f32 %v2553, 1.442695
        %v2569 = vpow.pop %v2568
        %v2570 = vsub.f32 %v2555, 1.0
        %v2571 = vsub.f32 %v2557, 1.0
        %v2572 = vsub.f32 %v2559, 1.0
        %v2573 = vsub.f32 %v2561, 1.0
        %v2574 = vsub.f32 %v2563, 1.0
        %v2575 = vsub.f32 %v2565, 1.0
        %v2576 = vsub.f32 %v2567, 1.0
        %v2577 = vsub.f32 %v2569, 1.0
        %v2578 = vmul.f32 %v2570, 1.6732632
        %v2579 = vmul.f32 %v2571, 1.6732632
        %v2580 = vmul.f32 %v2572, 1.6732632
        %v2581 = vmul.f32 %v2573, 1.6732632
        %v2582 = vmul.f32 %v2574, 1.6732632
        %v2583 = vmul.f32 %v2575, 1.6732632
        %v2584 = vmul.f32 %v2576, 1.6732632
        %v2585 = vmul.f32 %v2577, 1.6732632
        %vm2586 = vcmp.gt.f32.partialorder %v2538, 0.0
        %vm2587 = vcmp.gt.f32.partialorder %v2539, 0.0
        %vm2588 = vcmp.gt.f32.partialorder %v2540, 0.0
        %vm2589 = vcmp.gt.f32.partialorder %v2541, 0.0
        %vm2590 = vcmp.gt.f32.partialorder %v2542, 0.0
        %vm2591 = vcmp.gt.f32.partialorder %v2543, 0.0
        %vm2592 = vcmp.gt.f32.partialorder %v2544, 0.0
        %vm2593 = vcmp.gt.f32.partialorder %v2545, 0.0
        %v2594 = vsel %vm2586, %v2538, %v2578
        %v2595 = vsel %vm2587, %v2539, %v2579
        %v2596 = vsel %vm2588, %v2540, %v2580
        %v2597 = vsel %vm2589, %v2541, %v2581
        %v2598 = vsel %vm2590, %v2542, %v2582
        %v2599 = vsel %vm2591, %v2543, %v2583
        %v2600 = vsel %vm2592, %v2544, %v2584
        %v2601 = vsel %vm2593, %v2545, %v2585
        %v2602 = vmul.f32 %v2594, 1.050701
        %v2603 = vmul.f32 %v2595, 1.050701
        %v2604 = vmul.f32 %v2596, 1.050701
        %v2605 = vmul.f32 %v2597, 1.050701
        %v2606 = vmul.f32 %v2598, 1.050701
        %v2607 = vmul.f32 %v2599, 1.050701
        %v2608 = vmul.f32 %v2600, 1.050701
        %v2609 = vmul.f32 %v2601, 1.050701
        %v2610 = vpack.c.bf16 %v2602, %v2602
        %v2611 = vpack.c.bf16 %v2603, %v2603
        %v2612 = vpack.c.bf16 %v2604, %v2604
        %v2613 = vpack.c.bf16 %v2605, %v2605
        %v2614 = vpack.c.bf16 %v2606, %v2606
        %v2615 = vpack.c.bf16 %v2607, %v2607
        %v2616 = vpack.c.bf16 %v2608, %v2608
        %v2617 = vpack.c.bf16 %v2609, %v2609
        %2618 = vst.msk [vmem:[%s217] sm:$0xf] %vm296, %v2610
        %2619 = vst.msk [vmem:[%s217 + $0x4] sm:$0xf] %vm296, %v2611
        %2620 = vst.msk [vmem:[%s217 + $0x8] sm:$0xf] %vm296, %v2612
        %2621 = vst.msk [vmem:[%s217 + $0xc] sm:$0xf] %vm296, %v2613
        %2622 = vst.msk [vmem:[%s217 + $0x10] sm:$0xf] %vm296, %v2614
        %2623 = vst.msk [vmem:[%s217 + $0x14] sm:$0xf] %vm296, %v2615
        %2624 = vst.msk [vmem:[%s217 + $0x18] sm:$0xf] %vm296, %v2616
        %2625 = vst.msk [vmem:[%s217 + $0x1c] sm:$0xf] %vm296, %v2617
        %s2626 = sand.u32 %s137, 1
        %s2627 = scalar_lea.sflag [#allocation5], %s2626
        %s2628 = sand.u32 %s137, 1
        %s2629 = smul.addr %s2628, 32
        %s2630 = scalar_lea.vmem [#allocation4], %s2629
        // Predicated region
        $region41: #{down_forward.1} parent=39 // pred_check
          %p2631 = pneg %p147
        $region42: #{down_forward.1} parent=39 // pred_check_branch
          %2633 = sbr.rel (%p2631) target = $region44
        $region43: #{down_forward.1} parent=39 // pred_region
          %2635 = vsyncadd %s2627, 0
          %s2636 = smul.addr %s19, 8
          %s2637 = smul.addr %s2636, 4
          %s2638 = scalar_lea.hbm %s5, %s2637
          %s2639 = sshll.u32 %s2630, 4
          %s2640 = int_to_ptr.vmem [resolvable:$true] %s2639
          %s2641 = sshll.u32 %s2638, 4
          %s2642 = int_to_ptr.hbm [resolvable:$true] %s2641
          %2647 = dma.vmem_to_hbm [thread:$0]  %s2640, 512, %s2642, %s2627, 64, 64, 4
        $region44: #{down_forward.1} parent=39 // pred_fallthru
          _
      $region40: #{down_forward.1} parent=5 // pred_fallthru
        _
      %p2648 = scmp.le.s32.totalorder 2, %s14
      // Predicated region
      $region45: #{down_forward.1} parent=5 // pred_check
        %p2649 = pneg %p2648
      $region46: #{down_forward.1} parent=5 // pred_check_branch
        %2651 = sbr.rel (%p2649) target = $region48
      $region47: #{down_forward.1} parent=5 // pred_region
        %s2652 = ssub.s32 %s14, 2
        // Predicated region
        $region49: #{down_forward.1} parent=47 // pred_check
          %p2653 = pneg %p153
        $region50: #{down_forward.1} parent=47 // pred_check_branch
          %2655 = sbr.rel (%p2653) target = $region52
        $region51: #{down_forward.1} parent=47 // pred_region
          %s2656 = sand.u32 %s138, 1
          %s2657 = scalar_lea.sflag [#allocation5], %s2656
          %s2658 = sand.u32 %s138, 1
          %s2659 = smul.addr %s2658, 32
          %s2660 = scalar_lea.vmem [#allocation4], %s2659
          %2662 = dma.done %s2657, 512
        $region52: #{down_forward.1} parent=47 // pred_fallthru
          _
      $region48: #{down_forward.1} parent=5 // pred_fallthru
        _
    $region6: #{down_forward.1} parent=1 // loop_footer
      %s18 = sadd.s32 1, %s14
    $region7: #{down_forward.1} parent=1 // loop_footer_branch
      %13 = sbr.rel target = $region3
    $region8: #{down_forward.1} parent=1 // loop_exit
      _
    %2663 = vsyncpa [#allocation5], 1
    %s2664 = scalar_lea.sflag [#allocation5], 1
    %2665 = vsyncpa %s2664, 1

</llo_original>
